<compile_context>
chip_gen: v7x
topology: tpu7x:2x2x1
jax: 0.10.0
libtpu: 0.0.40
codegen_flags: <defaults>
</compile_context>

<pallas_src>
import jax
import jax.numpy as jnp
from jax.experimental import pallas as pl
from jax.experimental.pallas import tpu as pltpu


LANE = 128        # TPU lane width (last-dim vreg extent)
SUBLANE = 8       # f32 sublane count
NEG_BIG = -1e30   # effectively -inf for masking padded softmax columns


def _round_up(n, m):
    return ((n + m - 1) // m) * m


def _pick_block_b(B, target=512):
    """Largest divisor of B that is <= target and a sublane multiple."""
    if B <= target:
        return B
    for cand in range(min(target, B), 0, -1):
        if B % cand == 0 and cand % SUBLANE == 0:
            return cand
    return B


def _pad_cols(a, target, fill=0.0):
    pad = target - a.shape[1]
    if pad == 0:
        return a
    return jnp.concatenate([a, jnp.full((a.shape[0], pad), fill, a.dtype)], axis=1)


def _pad_rows(a, target, fill=0.0):
    pad = target - a.shape[0]
    if pad == 0:
        return a
    return jnp.concatenate([a, jnp.full((pad, a.shape[1]), fill, a.dtype)], axis=0)


def rfae_kernel(x_ref,
                w1_ref, b1_ref,
                w2_ref, b2_ref,
                w3_ref, b3_ref,
                w4_ref, b4_ref,
                z_ref, recon_ref):
    """Fused RFAE forward for one batch tile: 4 bf16 MXU matmuls (f32 accumulate),
    two ReLUs, bias adds, and a softmax over the (lane-padded) feature axis."""
    x = x_ref[...]                                                     # (bm, in_pad) bf16

    # ---- encoder: Linear(in_dim, hid) -> ReLU -> Linear(hid, z_pad) ----
    h1 = jnp.dot(x, w1_ref[...], preferred_element_type=jnp.float32) + b1_ref[...]
    h1 = jnp.maximum(h1, 0.0)
    z = jnp.dot(h1.astype(jnp.bfloat16), w2_ref[...],
                preferred_element_type=jnp.float32) + b2_ref[...]

    # ---- decoder: Linear(z_pad, hid) -> ReLU -> Linear(hid, in_pad) -> Softmax ----
    h2 = jnp.dot(z.astype(jnp.bfloat16), w3_ref[...],
                 preferred_element_type=jnp.float32) + b3_ref[...]
    h2 = jnp.maximum(h2, 0.0)
    logits = jnp.dot(h2.astype(jnp.bfloat16), w4_ref[...],
                     preferred_element_type=jnp.float32) + b4_ref[...]

    # Padded logit columns carry a -1e30 bias, so exp() == 0 there and the
    # softmax over the first in_dim columns is exact (matches Softmax(dim=1)).
    m = jnp.max(logits, axis=-1, keepdims=True)
    e = jnp.exp(logits - m)
    denom = jnp.sum(e, axis=-1, keepdims=True)
    recon = e * pl.reciprocal(denom, approx=False)   # exact divide on the EUP slot

    z_ref[...] = z.astype(z_ref.dtype)
    recon_ref[...] = recon.astype(recon_ref.dtype)


def rfae_forward(x, params, *, block_b=None, vmem_limit_bytes=None):
    """RFAE forward pass with a fused Pallas kernel.

    x: (B, in_dim) float32
    params: dict with w1 (in_dim,hid), b1 (1,hid), w2 (hid,z_dim), b2 (1,z_dim),
            w3 (z_dim,hid), b3 (1,hid), w4 (hid,in_dim), b4 (1,in_dim)
    Returns (z, recon) with shapes (B, z_dim), (B, in_dim), both float32.
    """
    B, in_dim = x.shape
    hid = params["w1"].shape[1]
    z_dim = params["w2"].shape[1]

    # Lane-dense widths (pad in_dim / z_dim up to the 128-lane width).
    z_pad = _round_up(z_dim, LANE)
    in_pad = _round_up(in_dim, LANE)

    # --- batch tile / grid ---
    if block_b is None:
        block_b = _pick_block_b(B)
    assert B % block_b == 0, "batch must be divisible by block_b"
    grid = (B // block_b,)

    # --- pack weights: bf16 (halves HBM traffic, native MXU rate), biases f32 ---
    bf16 = jnp.bfloat16
    f32 = jnp.float32
    w1 = _pad_rows(params["w1"], in_pad).astype(bf16)          # zero rows: no-op for padded x cols
    b1 = params["b1"].astype(f32)
    w2 = _pad_cols(params["w2"], z_pad).astype(bf16)
    b2 = _pad_cols(params["b2"], z_pad).astype(f32)
    w3 = _pad_rows(params["w3"], z_pad).astype(bf16)           # zero rows: no-op for padded z cols
    b3 = params["b3"].astype(f32)
    w4 = _pad_cols(params["w4"], in_pad).astype(bf16)
    b4 = _pad_cols(params["b4"].astype(f32), in_pad, fill=NEG_BIG)
    x_bf = _pad_cols(x, in_pad).astype(bf16)                   # lane-dense input loads

    # --- explicit VMEM budget (portable across 16 MiB scoped v5e / 64 MiB v7x) ---
    if vmem_limit_bytes is None:
        BF, F4 = 2, 4
        io = 2 * block_b * (in_pad * BF + z_pad * F4 + in_pad * F4)       # double-buffered tiles
        wts = 2 * BF * (in_pad * hid + hid * z_pad + z_pad * hid + hid * in_pad)
        bias = 2 * F4 * (2 * hid + z_pad + in_pad)
        interm = block_b * (2 * hid + z_pad + 2 * in_pad) * F4
        est = io + wts + bias + interm
        vmem_limit_bytes = int(min(max(4 * est, 16 * 2**20), 48 * 2**20))

    # --- cost hint for the XLA scheduler ---
    weight_bytes = 2 * (in_pad * hid + hid * z_pad + z_pad * hid + hid * in_pad) \
        + 4 * (2 * hid + z_pad + in_pad)
    cost = pl.CostEstimate(
        flops=2 * B * (in_pad * hid + hid * z_pad + z_pad * hid + hid * in_pad),
        transcendentals=B * in_pad,
        bytes_accessed=B * in_pad * 2 + B * (z_pad + in_pad) * 4 + weight_bytes,
    )

    batch_map = lambda i: (i, 0)
    const_map = lambda i: (0, 0)
    full = lambda shape: pl.BlockSpec(shape, const_map)

    out_shapes = (
        jax.ShapeDtypeStruct((B, z_pad), jnp.float32),
        jax.ShapeDtypeStruct((B, in_pad), jnp.float32),
    )

    f = pl.pallas_call(
        rfae_kernel,
        out_shape=out_shapes,
        grid_spec=pltpu.PrefetchScalarGridSpec(
            num_scalar_prefetch=0,
            grid=grid,
            in_specs=[
                pl.BlockSpec((block_b, in_pad), batch_map),    # x tile (lane-padded)
                full((in_pad, hid)), full((1, hid)),           # encoder layer 1
                full((hid, z_pad)), full((1, z_pad)),          # encoder layer 2 (lane-padded)
                full((z_pad, hid)), full((1, hid)),            # decoder layer 1
                full((hid, in_pad)), full((1, in_pad)),        # decoder layer 2 (lane-padded)
            ],
            out_specs=[
                pl.BlockSpec((block_b, z_pad), batch_map),
                pl.BlockSpec((block_b, in_pad), batch_map),
            ],
        ),
        compiler_params=pltpu.CompilerParams(
            dimension_semantics=("parallel",),     # shards grid steps across v7x's 2 TCs
            vmem_limit_bytes=vmem_limit_bytes,
        ),
        cost_estimate=cost,
    )
    z_full, recon_full = f(x_bf,
                           w1, b1, w2, b2, w3, b3, w4, b4)
    return z_full[:, :z_dim], recon_full[:, :in_dim]


def init_params(key, in_dim, z_dim=32, hid=256):
    """Deterministic PyTorch-Linear-style init (uniform ±1/sqrt(fan_in))."""
    ks = jax.random.split(key, 8)

    def lin(kw, kb, fan_in, fan_out):
        bound = 1.0 / jnp.sqrt(fan_in)
        w = jax.random.uniform(kw, (fan_in, fan_out), jnp.float32, -bound, bound)
        b = jax.random.uniform(kb, (1, fan_out), jnp.float32, -bound, bound)
        return w, b

    w1, b1 = lin(ks[0], ks[1], in_dim, hid)
    w2, b2 = lin(ks[2], ks[3], hid, z_dim)
    w3, b3 = lin(ks[4], ks[5], z_dim, hid)
    w4, b4 = lin(ks[6], ks[7], hid, in_dim)
    return dict(w1=w1, b1=b1, w2=w2, b2=b2, w3=w3, b3=b3, w4=w4, b4=b4)


def rfae_reference(x, p):
    """Pure-JAX reference using the same bf16-weight / f32-accumulate recipe."""
    bf = lambda a: a.astype(jnp.bfloat16)
    dot = lambda a, b: jnp.dot(bf(a), bf(b), preferred_element_type=jnp.float32)
    h1 = jnp.maximum(dot(x, p["w1"]) + p["b1"], 0.0)
    z = dot(h1, p["w2"]) + p["b2"]
    h2 = jnp.maximum(dot(z, p["w3"]) + p["b3"], 0.0)
    logits = dot(h2, p["w4"]) + p["b4"]
    recon = jax.nn.softmax(logits, axis=1)
    return z, recon


if __name__ == "__main__":
    key = jax.random.PRNGKey(0)
    k_param, k_x = jax.random.split(key)

    # Small but multi-tile shapes: grid of 4 batch tiles exercises pipelining /
    # megacore sharding while staying tiny.
    B, in_dim, z_dim, hid = 512, 64, 32, 256
    block_b = 128

    params = init_params(k_param, in_dim, z_dim=z_dim, hid=hid)
    x = jax.random.normal(k_x, (B, in_dim), jnp.float32)

    z, recon = rfae_forward(x, params, block_b=block_b)
    z = jax.block_until_ready(z)
    recon = jax.block_until_ready(recon)

    z_ref, recon_ref = rfae_reference(x, params)
    assert z.shape == (B, z_dim) and recon.shape == (B, in_dim)
    assert jnp.allclose(z, z_ref, atol=1e-3, rtol=1e-3)
    assert jnp.allclose(recon, recon_ref, atol=1e-4, rtol=1e-3)
    # softmax rows should sum to 1
    assert jnp.allclose(jnp.sum(recon, axis=1), 1.0, atol=1e-5)

    print("KERNEL_OK")
</pallas_src>

<mosaic_0001>
module attributes {stable_mosaic.version = 11 : i64} {
  func.func @rfae_kernel(%arg0: i32, %arg1: memref<128x128xbf16, #tpu.memory_space<vmem>>, %arg2: memref<128x256xbf16, #tpu.memory_space<vmem>>, %arg3: memref<1x256xf32, #tpu.memory_space<vmem>>, %arg4: memref<256x128xbf16, #tpu.memory_space<vmem>>, %arg5: memref<1x128xf32, #tpu.memory_space<vmem>>, %arg6: memref<128x256xbf16, #tpu.memory_space<vmem>>, %arg7: memref<1x256xf32, #tpu.memory_space<vmem>>, %arg8: memref<256x128xbf16, #tpu.memory_space<vmem>>, %arg9: memref<1x128xf32, #tpu.memory_space<vmem>>, %arg10: memref<128x128xf32, #tpu.memory_space<vmem>>, %arg11: memref<128x128xf32, #tpu.memory_space<vmem>>) attributes {dimension_semantics = [#tpu.dimension_semantics<parallel>], iteration_bounds = array<i64: 4>, scalar_prefetch = 0 : i64, scratch_operands = 0 : i64, tpu.core_type = #tpu.core_type<tc>, window_params = [{transform_indices = @transform_0, window_bounds = array<i64: 128, 128>}, {pipeline_mode = #tpu.pipeline_mode<synchronous>, transform_indices = @transform_1, window_bounds = array<i64: 128, 256>}, {pipeline_mode = #tpu.pipeline_mode<synchronous>, transform_indices = @transform_2, window_bounds = array<i64: 1, 256>}, {pipeline_mode = #tpu.pipeline_mode<synchronous>, transform_indices = @transform_3, window_bounds = array<i64: 256, 128>}, {pipeline_mode = #tpu.pipeline_mode<synchronous>, transform_indices = @transform_4, window_bounds = array<i64: 1, 128>}, {pipeline_mode = #tpu.pipeline_mode<synchronous>, transform_indices = @transform_5, window_bounds = array<i64: 128, 256>}, {pipeline_mode = #tpu.pipeline_mode<synchronous>, transform_indices = @transform_6, window_bounds = array<i64: 1, 256>}, {pipeline_mode = #tpu.pipeline_mode<synchronous>, transform_indices = @transform_7, window_bounds = array<i64: 256, 128>}, {pipeline_mode = #tpu.pipeline_mode<synchronous>, transform_indices = @transform_8, window_bounds = array<i64: 1, 128>}, {transform_indices = @transform_9, window_bounds = array<i64: 128, 128>}, {transform_indices = @transform_10, window_bounds = array<i64: 128, 128>}]} {
    %c0 = arith.constant 0 : index
    %c0_0 = arith.constant 0 : index
    %0 = vector.load %arg1[%c0, %c0_0] : memref<128x128xbf16, #tpu.memory_space<vmem>>, vector<128x128xbf16>
    %c0_1 = arith.constant 0 : index
    %c0_2 = arith.constant 0 : index
    %1 = vector.load %arg2[%c0_1, %c0_2] : memref<128x256xbf16, #tpu.memory_space<vmem>>, vector<128x256xbf16>
    %cst = arith.constant dense<0.000000e+00> : vector<128x256xf32>
    %2 = tpu.matmul %0, %1, %cst {dimension_numbers = #tpu.dot_dimension_numbers<[1], [0], [0], [1], [0, 0, 1, 1], [], []>} : vector<128x128xbf16>, vector<128x256xbf16>, vector<128x256xf32> -> vector<128x256xf32>
    %c0_3 = arith.constant 0 : index
    %c0_4 = arith.constant 0 : index
    %3 = vector.load %arg3[%c0_3, %c0_4] : memref<1x256xf32, #tpu.memory_space<vmem>>, vector<1x256xf32>
    %4 = vector.broadcast %3 : vector<1x256xf32> to vector<128x256xf32>
    %5 = arith.addf %2, %4 : vector<128x256xf32>
    %cst_5 = arith.constant 0.000000e+00 : f32
    %6 = vector.broadcast %cst_5 : f32 to vector<128x256xf32>
    %7 = arith.maximumf %5, %6 : vector<128x256xf32>
    %8 = arith.truncf %7 : vector<128x256xf32> to vector<128x256xbf16>
    %c0_6 = arith.constant 0 : index
    %c0_7 = arith.constant 0 : index
    %9 = vector.load %arg4[%c0_6, %c0_7] : memref<256x128xbf16, #tpu.memory_space<vmem>>, vector<256x128xbf16>
    %cst_8 = arith.constant dense<0.000000e+00> : vector<128x128xf32>
    %10 = tpu.matmul %8, %9, %cst_8 {dimension_numbers = #tpu.dot_dimension_numbers<[1], [0], [0], [1], [0, 0, 1, 1], [], []>} : vector<128x256xbf16>, vector<256x128xbf16>, vector<128x128xf32> -> vector<128x128xf32>
    %c0_9 = arith.constant 0 : index
    %c0_10 = arith.constant 0 : index
    %11 = vector.load %arg5[%c0_9, %c0_10] : memref<1x128xf32, #tpu.memory_space<vmem>>, vector<1x128xf32>
    %12 = vector.broadcast %11 : vector<1x128xf32> to vector<128x128xf32>
    %13 = arith.addf %10, %12 : vector<128x128xf32>
    %14 = arith.truncf %13 : vector<128x128xf32> to vector<128x128xbf16>
    %c0_11 = arith.constant 0 : index
    %c0_12 = arith.constant 0 : index
    %15 = vector.load %arg6[%c0_11, %c0_12] : memref<128x256xbf16, #tpu.memory_space<vmem>>, vector<128x256xbf16>
    %cst_13 = arith.constant dense<0.000000e+00> : vector<128x256xf32>
    %16 = tpu.matmul %14, %15, %cst_13 {dimension_numbers = #tpu.dot_dimension_numbers<[1], [0], [0], [1], [0, 0, 1, 1], [], []>} : vector<128x128xbf16>, vector<128x256xbf16>, vector<128x256xf32> -> vector<128x256xf32>
    %c0_14 = arith.constant 0 : index
    %c0_15 = arith.constant 0 : index
    %17 = vector.load %arg7[%c0_14, %c0_15] : memref<1x256xf32, #tpu.memory_space<vmem>>, vector<1x256xf32>
    %18 = vector.broadcast %17 : vector<1x256xf32> to vector<128x256xf32>
    %19 = arith.addf %16, %18 : vector<128x256xf32>
    %cst_16 = arith.constant 0.000000e+00 : f32
    %20 = vector.broadcast %cst_16 : f32 to vector<128x256xf32>
    %21 = arith.maximumf %19, %20 : vector<128x256xf32>
    %22 = arith.truncf %21 : vector<128x256xf32> to vector<128x256xbf16>
    %c0_17 = arith.constant 0 : index
    %c0_18 = arith.constant 0 : index
    %23 = vector.load %arg8[%c0_17, %c0_18] : memref<256x128xbf16, #tpu.memory_space<vmem>>, vector<256x128xbf16>
    %cst_19 = arith.constant dense<0.000000e+00> : vector<128x128xf32>
    %24 = tpu.matmul %22, %23, %cst_19 {dimension_numbers = #tpu.dot_dimension_numbers<[1], [0], [0], [1], [0, 0, 1, 1], [], []>} : vector<128x256xbf16>, vector<256x128xbf16>, vector<128x128xf32> -> vector<128x128xf32>
    %c0_20 = arith.constant 0 : index
    %c0_21 = arith.constant 0 : index
    %25 = vector.load %arg9[%c0_20, %c0_21] : memref<1x128xf32, #tpu.memory_space<vmem>>, vector<1x128xf32>
    %26 = vector.broadcast %25 : vector<1x128xf32> to vector<128x128xf32>
    %27 = arith.addf %24, %26 : vector<128x128xf32>
    %cst_22 = arith.constant dense<0xFF800000> : vector<128xf32>
    %28 = vector.multi_reduction <maximumf>, %27, %cst_22 [1] : vector<128x128xf32> to vector<128xf32>
    %29 = vector.shape_cast %28 : vector<128xf32> to vector<128x1xf32>
    %30 = vector.broadcast %29 : vector<128x1xf32> to vector<128x128xf32>
    %31 = arith.subf %27, %30 : vector<128x128xf32>
    %32 = math.exp %31 : vector<128x128xf32>
    %cst_23 = arith.constant dense<0.000000e+00> : vector<128xf32>
    %33 = vector.multi_reduction <add>, %32, %cst_23 [1] : vector<128x128xf32> to vector<128xf32>
    %34 = vector.shape_cast %33 : vector<128xf32> to vector<128x1xf32>
    %35 = tpu.reciprocal %34 : vector<128x1xf32> -> vector<128x1xf32>
    %36 = vector.broadcast %35 : vector<128x1xf32> to vector<128x128xf32>
    %37 = arith.mulf %32, %36 : vector<128x128xf32>
    %c0_24 = arith.constant 0 : index
    %c0_25 = arith.constant 0 : index
    %38 = vector.load %arg10[%c0_24, %c0_25] : memref<128x128xf32, #tpu.memory_space<vmem>>, vector<128x128xf32>
    tpu.vector_store %arg10[%c0_24, %c0_25], %13 {strides = array<i32>} : memref<128x128xf32, #tpu.memory_space<vmem>>, vector<128x128xf32>,
    %c0_26 = arith.constant 0 : index
    %c0_27 = arith.constant 0 : index
    %39 = vector.load %arg11[%c0_26, %c0_27] : memref<128x128xf32, #tpu.memory_space<vmem>>, vector<128x128xf32>
    tpu.vector_store %arg11[%c0_26, %c0_27], %37 {strides = array<i32>} : memref<128x128xf32, #tpu.memory_space<vmem>>, vector<128x128xf32>,
    return
  }
  func.func @transform_0(%arg0: i32) -> (i32, i32) {
    %c0_i32 = arith.constant 0 : i32
    %c0_i32_0 = arith.constant 0 : i32
    return %arg0, %c0_i32 : i32, i32
  }
  func.func @transform_1(%arg0: i32) -> (i32, i32) {
    %c0_i32 = arith.constant 0 : i32
    %c0_i32_0 = arith.constant 0 : i32
    %c0_i32_1 = arith.constant 0 : i32
    return %c0_i32, %c0_i32_0 : i32, i32
  }
  func.func @transform_2(%arg0: i32) -> (i32, i32) {
    %c0_i32 = arith.constant 0 : i32
    %c0_i32_0 = arith.constant 0 : i32
    %c0_i32_1 = arith.constant 0 : i32
    return %c0_i32, %c0_i32_0 : i32, i32
  }
  func.func @transform_3(%arg0: i32) -> (i32, i32) {
    %c0_i32 = arith.constant 0 : i32
    %c0_i32_0 = arith.constant 0 : i32
    %c0_i32_1 = arith.constant 0 : i32
    return %c0_i32, %c0_i32_0 : i32, i32
  }
  func.func @transform_4(%arg0: i32) -> (i32, i32) {
    %c0_i32 = arith.constant 0 : i32
    %c0_i32_0 = arith.constant 0 : i32
    %c0_i32_1 = arith.constant 0 : i32
    return %c0_i32, %c0_i32_0 : i32, i32
  }
  func.func @transform_5(%arg0: i32) -> (i32, i32) {
    %c0_i32 = arith.constant 0 : i32
    %c0_i32_0 = arith.constant 0 : i32
    %c0_i32_1 = arith.constant 0 : i32
    return %c0_i32, %c0_i32_0 : i32, i32
  }
  func.func @transform_6(%arg0: i32) -> (i32, i32) {
    %c0_i32 = arith.constant 0 : i32
    %c0_i32_0 = arith.constant 0 : i32
    %c0_i32_1 = arith.constant 0 : i32
    return %c0_i32, %c0_i32_0 : i32, i32
  }
  func.func @transform_7(%arg0: i32) -> (i32, i32) {
    %c0_i32 = arith.constant 0 : i32
    %c0_i32_0 = arith.constant 0 : i32
    %c0_i32_1 = arith.constant 0 : i32
    return %c0_i32, %c0_i32_0 : i32, i32
  }
  func.func @transform_8(%arg0: i32) -> (i32, i32) {
    %c0_i32 = arith.constant 0 : i32
    %c0_i32_0 = arith.constant 0 : i32
    %c0_i32_1 = arith.constant 0 : i32
    return %c0_i32, %c0_i32_0 : i32, i32
  }
  func.func @transform_9(%arg0: i32) -> (i32, i32) {
    %c0_i32 = arith.constant 0 : i32
    %c0_i32_0 = arith.constant 0 : i32
    return %arg0, %c0_i32 : i32, i32
  }
  func.func @transform_10(%arg0: i32) -> (i32, i32) {
    %c0_i32 = arith.constant 0 : i32
    %c0_i32_0 = arith.constant 0 : i32
    return %arg0, %c0_i32 : i32, i32
  }
}

</mosaic_0001>

<llo_original>
// kernel: tpu_custom_call.1
$region0: #{tpu_custom_call.1}
  #allocation0 [shape = 'u32[]', space=smem, size = 0x4, offset = 0x4, fixed_abs, tag = 'smem constant byte address 0x4 - core index']
  #allocation1 [shape = 'u32[144,128]{1,0:T(1,128)}', space=vmem, size = 0x12000, scoped, tag = 'internal scratch']
  %s0 = inlined_call_operand.hbm [shape: bf16[512,128], index: 0, kind: input, shape index: {}]
  %s1 = inlined_call_operand.hbm [shape: bf16[128,256], index: 1, kind: input, shape index: {}]
  %s2 = inlined_call_operand.vmem [shape: f32[1,256], index: 2, kind: input, shape index: {}]
  %s3 = inlined_call_operand.hbm [shape: bf16[256,128], index: 3, kind: input, shape index: {}]
  %s4 = inlined_call_operand.vmem [shape: f32[1,128], index: 4, kind: input, shape index: {}]
  %s5 = inlined_call_operand.hbm [shape: bf16[128,256], index: 5, kind: input, shape index: {}]
  %s6 = inlined_call_operand.vmem [shape: f32[1,256], index: 6, kind: input, shape index: {}]
  %s7 = inlined_call_operand.hbm [shape: bf16[256,128], index: 7, kind: input, shape index: {}]
  %s8 = inlined_call_operand.vmem [shape: f32[1,128], index: 8, kind: input, shape index: {}]
  %s9 = inlined_call_operand.hbm [shape: f32[512,128], index: 9, kind: output, shape index: {0}]
  %s10 = inlined_call_operand.hbm [shape: f32[512,128], index: 10, kind: output, shape index: {1}]
  %11 = xla_tuple %s9, %s10
  %s12 = sld [smem:[#allocation0]]
  $region97: #{tpu_custom_call.1} parent=0
    _
  %s14 = ssub.s32 1, %s12
  %s15 = scalar_select 0, %s14, %s12
  $region1: #{tpu_custom_call.1} parent=0
    #allocation2 [shape = 'u8[65536]{0}', space=vmem, size = 0x10000, scoped, tag = 'input window, operand 0']
    #allocation3 [shape = 's32[2]{0}', space=sflag, size = 0x8, scoped, tag = 'scoped memory for tpu_custom_call.1']
    #allocation4 [shape = 's32[2]{0}', space=sflag, size = 0x8, scoped, tag = 'scoped memory for tpu_custom_call.1']
    #allocation5 [shape = 'u8[65536]{0}', space=vmem, size = 0x10000, scoped, tag = 'input window, operand 1, single buffered']
    #allocation6 [shape = 's32[1]{0}', space=sflag, size = 0x4, scoped, tag = 'scoped memory for tpu_custom_call.1']
    #allocation7 [shape = 'u8[65536]{0}', space=vmem, size = 0x10000, scoped, tag = 'input window, operand 3, single buffered']
    #allocation8 [shape = 'u8[65536]{0}', space=vmem, size = 0x10000, scoped, tag = 'input window, operand 5, single buffered']
    #allocation9 [shape = 's32[1]{0}', space=sflag, size = 0x4, scoped, tag = 'scoped memory for tpu_custom_call.1']
    #allocation10 [shape = 'u8[65536]{0}', space=vmem, size = 0x10000, scoped, tag = 'input window, operand 7, single buffered']
    #allocation11 [shape = 'u8[131072]{0}', space=vmem, size = 0x20000, scoped, tag = 'output window, operand 0']
    #allocation12 [shape = 'u8[131072]{0}', space=vmem, size = 0x20000, scoped, tag = 'output window, operand 1']
    #allocation13 [shape = 's32[2]{0}', space=sflag, size = 0x8, scoped, tag = 'scoped memory for tpu_custom_call.1']
    %16 = vsyncpa [#allocation3], 0
    %s17 = scalar_lea.sflag [#allocation3], 1
    %18 = vsyncpa %s17, 0
    %19 = vsyncpa [#allocation6], 0
    %20 = vsyncpa [#allocation9], 0
    %21 = vsyncpa [#allocation4], 0
    %s22 = scalar_lea.sflag [#allocation4], 1
    %23 = vsyncpa %s22, 0
    %24 = vsyncpa [#allocation13], 0
    %s25 = scalar_lea.sflag [#allocation13], 1
    %26 = vsyncpa %s25, 0
    loop: start=0, step=1, limit=6
    $region2: #{tpu_custom_call.1} parent=1 // loop_pre_header
      _
    $region3: #{tpu_custom_call.1} parent=1 // loop_header
      %s28 = sphi 0, %s32
      %p29 = scmp.ge.s32.totalorder %s28, 6
      %s38 = sphi 0, %s40
      %s41 = sphi 0, %s38
      %s42 = sphi 0, %s41
      %s58 = sphi 0, %s42
      %s62 = sphi 0, %s62
      %s64 = sphi 0, %s62
      %s65 = sphi 0, %s64
      %s79 = sphi 0, %s65
      %s83 = sphi 0, %s83
      %s85 = sphi 0, %s83
      %s86 = sphi 0, %s85
      %s100 = sphi 0, %s86
      %s104 = sphi 0, %s104
      %s106 = sphi 0, %s104
      %s107 = sphi 0, %s106
      %s121 = sphi 0, %s107
      %s125 = sphi 0, %s125
      %s127 = sphi 0, %s125
      %s128 = sphi 0, %s127
      %s142 = sphi 0, %s128
      %s146 = sphi 0, %s146
      %s148 = sphi 0, %s146
      %s149 = sphi 0, %s148
      %s163 = sphi 0, %s149
      %s167 = sphi 0, %s167
      %s169 = sphi 0, %s167
      %s170 = sphi 0, %s169
      %s184 = sphi 0, %s170
      %s188 = sphi 0, %s188
      %s190 = sphi 0, %s188
      %s191 = sphi 0, %s190
      %s205 = sphi 0, %s191
      %s209 = sphi 0, %s209
      %s211 = sphi 0, %s209
      %s212 = sphi 0, %s211
      %s226 = sphi 0, %s212
      %s232 = sphi 0, %s234
      %s235 = sphi 0, %s232
      %s236 = sphi 0, %s235
      %s252 = sphi 0, %s236
      %s258 = sphi 0, %s260
      %s261 = sphi 0, %s258
      %s262 = sphi 0, %s261
      %s278 = sphi 0, %s262
    $region4: #{tpu_custom_call.1} parent=1 // loop_header_branch
      %31 = sbr.rel (%p29) target = $region8
    $region5: #{tpu_custom_call.1} parent=1 // loop_body
      %s33 = ssub.s32 %s28, 1
      %s34 = ssub.s32 %s28, 2
      %s35 = sadd.s32 %s28, 1
      %s36 = ssub.s32 %s28, %s35
      %p37 = scmp.eq.s32.totalorder %s36, 0
      %s39 = sadd.s32 %s38, 1
      %s40 = scalar_select %p37, %s38, %s39
      %p43 = pneg %p37
      %p44 = scmp.eq.s32.totalorder %s28, 3
      %p45 = por %p43, %p44
      %p46 = scmp.ne.s32.totalorder %s38, %s41
      %p47 = scmp.eq.s32.totalorder %s28, 0
      %p48 = por %p46, %p47
      %p49 = scmp.ne.s32.totalorder %s38, %s41
      %p50 = scmp.eq.s32.totalorder %s33, 3
      %p51 = por %p49, %p50
      %p52 = scmp.ne.s32.totalorder %s41, %s42
      %p53 = scmp.eq.s32.totalorder %s33, 0
      %p54 = por %p52, %p53
      %p55 = scmp.ne.s32.totalorder %s41, %s42
      %p56 = scmp.eq.s32.totalorder %s34, 3
      %p57 = por %p55, %p56
      %p59 = scmp.ne.s32.totalorder %s42, %s58
      %p60 = scmp.eq.s32.totalorder %s34, 0
      %p61 = por %p59, %p60
      %s63 = sadd.s32 %s62, 1
      %p66 = scmp.eq.s32.totalorder %s28, 3
      %p67 = scmp.ne.s32.totalorder %s62, %s64
      %p68 = scmp.eq.s32.totalorder %s28, 0
      %p69 = por %p67, %p68
      %p70 = scmp.ne.s32.totalorder %s62, %s64
      %p71 = scmp.eq.s32.totalorder %s33, 3
      %p72 = por %p70, %p71
      %p73 = scmp.ne.s32.totalorder %s64, %s65
      %p74 = scmp.eq.s32.totalorder %s33, 0
      %p75 = por %p73, %p74
      %p76 = scmp.ne.s32.totalorder %s64, %s65
      %p77 = scmp.eq.s32.totalorder %s34, 3
      %p78 = por %p76, %p77
      %p80 = scmp.ne.s32.totalorder %s65, %s79
      %p81 = scmp.eq.s32.totalorder %s34, 0
      %p82 = por %p80, %p81
      %s84 = sadd.s32 %s83, 1
      %p87 = scmp.eq.s32.totalorder %s28, 3
      %p88 = scmp.ne.s32.totalorder %s83, %s85
      %p89 = scmp.eq.s32.totalorder %s28, 0
      %p90 = por %p88, %p89
      %p91 = scmp.ne.s32.totalorder %s83, %s85
      %p92 = scmp.eq.s32.totalorder %s33, 3
      %p93 = por %p91, %p92
      %p94 = scmp.ne.s32.totalorder %s85, %s86
      %p95 = scmp.eq.s32.totalorder %s33, 0
      %p96 = por %p94, %p95
      %p97 = scmp.ne.s32.totalorder %s85, %s86
      %p98 = scmp.eq.s32.totalorder %s34, 3
      %p99 = por %p97, %p98
      %p101 = scmp.ne.s32.totalorder %s86, %s100
      %p102 = scmp.eq.s32.totalorder %s34, 0
      %p103 = por %p101, %p102
      %s105 = sadd.s32 %s104, 1
      %p108 = scmp.eq.s32.totalorder %s28, 3
      %p109 = scmp.ne.s32.totalorder %s104, %s106
      %p110 = scmp.eq.s32.totalorder %s28, 0
      %p111 = por %p109, %p110
      %p112 = scmp.ne.s32.totalorder %s104, %s106
      %p113 = scmp.eq.s32.totalorder %s33, 3
      %p114 = por %p112, %p113
      %p115 = scmp.ne.s32.totalorder %s106, %s107
      %p116 = scmp.eq.s32.totalorder %s33, 0
      %p117 = por %p115, %p116
      %p118 = scmp.ne.s32.totalorder %s106, %s107
      %p119 = scmp.eq.s32.totalorder %s34, 3
      %p120 = por %p118, %p119
      %p122 = scmp.ne.s32.totalorder %s107, %s121
      %p123 = scmp.eq.s32.totalorder %s34, 0
      %p124 = por %p122, %p123
      %s126 = sadd.s32 %s125, 1
      %p129 = scmp.eq.s32.totalorder %s28, 3
      %p130 = scmp.ne.s32.totalorder %s125, %s127
      %p131 = scmp.eq.s32.totalorder %s28, 0
      %p132 = por %p130, %p131
      %p133 = scmp.ne.s32.totalorder %s125, %s127
      %p134 = scmp.eq.s32.totalorder %s33, 3
      %p135 = por %p133, %p134
      %p136 = scmp.ne.s32.totalorder %s127, %s128
      %p137 = scmp.eq.s32.totalorder %s33, 0
      %p138 = por %p136, %p137
      %p139 = scmp.ne.s32.totalorder %s127, %s128
      %p140 = scmp.eq.s32.totalorder %s34, 3
      %p141 = por %p139, %p140
      %p143 = scmp.ne.s32.totalorder %s128, %s142
      %p144 = scmp.eq.s32.totalorder %s34, 0
      %p145 = por %p143, %p144
      %s147 = sadd.s32 %s146, 1
      %p150 = scmp.eq.s32.totalorder %s28, 3
      %p151 = scmp.ne.s32.totalorder %s146, %s148
      %p152 = scmp.eq.s32.totalorder %s28, 0
      %p153 = por %p151, %p152
      %p154 = scmp.ne.s32.totalorder %s146, %s148
      %p155 = scmp.eq.s32.totalorder %s33, 3
      %p156 = por %p154, %p155
      %p157 = scmp.ne.s32.totalorder %s148, %s149
      %p158 = scmp.eq.s32.totalorder %s33, 0
      %p159 = por %p157, %p158
      %p160 = scmp.ne.s32.totalorder %s148, %s149
      %p161 = scmp.eq.s32.totalorder %s34, 3
      %p162 = por %p160, %p161
      %p164 = scmp.ne.s32.totalorder %s149, %s163
      %p165 = scmp.eq.s32.totalorder %s34, 0
      %p166 = por %p164, %p165
      %s168 = sadd.s32 %s167, 1
      %p171 = scmp.eq.s32.totalorder %s28, 3
      %p172 = scmp.ne.s32.totalorder %s167, %s169
      %p173 = scmp.eq.s32.totalorder %s28, 0
      %p174 = por %p172, %p173
      %p175 = scmp.ne.s32.totalorder %s167, %s169
      %p176 = scmp.eq.s32.totalorder %s33, 3
      %p177 = por %p175, %p176
      %p178 = scmp.ne.s32.totalorder %s169, %s170
      %p179 = scmp.eq.s32.totalorder %s33, 0
      %p180 = por %p178, %p179
      %p181 = scmp.ne.s32.totalorder %s169, %s170
      %p182 = scmp.eq.s32.totalorder %s34, 3
      %p183 = por %p181, %p182
      %p185 = scmp.ne.s32.totalorder %s170, %s184
      %p186 = scmp.eq.s32.totalorder %s34, 0
      %p187 = por %p185, %p186
      %s189 = sadd.s32 %s188, 1
      %p192 = scmp.eq.s32.totalorder %s28, 3
      %p193 = scmp.ne.s32.totalorder %s188, %s190
      %p194 = scmp.eq.s32.totalorder %s28, 0
      %p195 = por %p193, %p194
      %p196 = scmp.ne.s32.totalorder %s188, %s190
      %p197 = scmp.eq.s32.totalorder %s33, 3
      %p198 = por %p196, %p197
      %p199 = scmp.ne.s32.totalorder %s190, %s191
      %p200 = scmp.eq.s32.totalorder %s33, 0
      %p201 = por %p199, %p200
      %p202 = scmp.ne.s32.totalorder %s190, %s191
      %p203 = scmp.eq.s32.totalorder %s34, 3
      %p204 = por %p202, %p203
      %p206 = scmp.ne.s32.totalorder %s191, %s205
      %p207 = scmp.eq.s32.totalorder %s34, 0
      %p208 = por %p206, %p207
      %s210 = sadd.s32 %s209, 1
      %p213 = scmp.eq.s32.totalorder %s28, 3
      %p214 = scmp.ne.s32.totalorder %s209, %s211
      %p215 = scmp.eq.s32.totalorder %s28, 0
      %p216 = por %p214, %p215
      %p217 = scmp.ne.s32.totalorder %s209, %s211
      %p218 = scmp.eq.s32.totalorder %s33, 3
      %p219 = por %p217, %p218
      %p220 = scmp.ne.s32.totalorder %s211, %s212
      %p221 = scmp.eq.s32.totalorder %s33, 0
      %p222 = por %p220, %p221
      %p223 = scmp.ne.s32.totalorder %s211, %s212
      %p224 = scmp.eq.s32.totalorder %s34, 3
      %p225 = por %p223, %p224
      %p227 = scmp.ne.s32.totalorder %s212, %s226
      %p228 = scmp.eq.s32.totalorder %s34, 0
      %p229 = por %p227, %p228
      %s230 = ssub.s32 %s28, %s35
      %p231 = scmp.eq.s32.totalorder %s230, 0
      %s233 = sadd.s32 %s232, 1
      %s234 = scalar_select %p231, %s232, %s233
      %p237 = pneg %p231
      %p238 = scmp.eq.s32.totalorder %s28, 3
      %p239 = por %p237, %p238
      %p240 = scmp.ne.s32.totalorder %s232, %s235
      %p241 = scmp.eq.s32.totalorder %s28, 0
      %p242 = por %p240, %p241
      %p243 = scmp.ne.s32.totalorder %s232, %s235
      %p244 = scmp.eq.s32.totalorder %s33, 3
      %p245 = por %p243, %p244
      %p246 = scmp.ne.s32.totalorder %s235, %s236
      %p247 = scmp.eq.s32.totalorder %s33, 0
      %p248 = por %p246, %p247
      %p249 = scmp.ne.s32.totalorder %s235, %s236
      %p250 = scmp.eq.s32.totalorder %s34, 3
      %p251 = por %p249, %p250
      %p253 = scmp.ne.s32.totalorder %s236, %s252
      %p254 = scmp.eq.s32.totalorder %s34, 0
      %p255 = por %p253, %p254
      %s256 = ssub.s32 %s28, %s35
      %p257 = scmp.eq.s32.totalorder %s256, 0
      %s259 = sadd.s32 %s258, 1
      %s260 = scalar_select %p257, %s258, %s259
      %p263 = pneg %p257
      %p264 = scmp.eq.s32.totalorder %s28, 3
      %p265 = por %p263, %p264
      %p266 = scmp.ne.s32.totalorder %s258, %s261
      %p267 = scmp.eq.s32.totalorder %s28, 0
      %p268 = por %p266, %p267
      %p269 = scmp.ne.s32.totalorder %s258, %s261
      %p270 = scmp.eq.s32.totalorder %s33, 3
      %p271 = por %p269, %p270
      %p272 = scmp.ne.s32.totalorder %s261, %s262
      %p273 = scmp.eq.s32.totalorder %s33, 0
      %p274 = por %p272, %p273
      %p275 = scmp.ne.s32.totalorder %s261, %s262
      %p276 = scmp.eq.s32.totalorder %s34, 3
      %p277 = por %p275, %p276
      %p279 = scmp.ne.s32.totalorder %s262, %s278
      %p280 = scmp.eq.s32.totalorder %s34, 0
      %p281 = por %p279, %p280
      %p282 = scmp.le.s32.totalorder 1, %s28
      %p283 = scmp.lt.s32.totalorder %s28, 5
      %p284 = pnand %p282, %p283
      %p285 = pneg %p284
      // Predicated region
      $region9: #{tpu_custom_call.1} parent=5 // pred_check
        _
      $region10: #{tpu_custom_call.1} parent=5 // pred_check_branch
        %287 = sbr.rel (%p284) target = $region12
      $region11: #{tpu_custom_call.1} parent=5 // pred_region
        %s288 = ssub.s32 %s28, 1
        // Predicated region
        $region13: #{tpu_custom_call.1} parent=11 // pred_check
          %p289 = pneg %p75
        $region14: #{tpu_custom_call.1} parent=11 // pred_check_branch
          %291 = sbr.rel (%p289) target = $region16
        $region15: #{tpu_custom_call.1} parent=11 // pred_region
          %s293 = ssub.s32 2048, 2048
          %294 = vsyncadd [#allocation6], %s293
          %s295 = sshll.u32 [#allocation5], 4
          %s296 = int_to_ptr.vmem [resolvable:$true] %s295
          %301 = dma.hbm_to_vmem [thread:$0]  %s1, 2048, %s296, [#allocation6], 128, 128, 8
        $region16: #{tpu_custom_call.1} parent=11 // pred_fallthru
          _
        // Predicated region
        $region17: #{tpu_custom_call.1} parent=11 // pred_check
          %p302 = pneg %p96
        $region18: #{tpu_custom_call.1} parent=11 // pred_check_branch
          %304 = sbr.rel (%p302) target = $region20
        $region19: #{tpu_custom_call.1} parent=11 // pred_region
          _
        $region20: #{tpu_custom_call.1} parent=11 // pred_fallthru
          _
        // Predicated region
        $region21: #{tpu_custom_call.1} parent=11 // pred_check
          %p305 = pneg %p117
        $region22: #{tpu_custom_call.1} parent=11 // pred_check_branch
          %307 = sbr.rel (%p305) target = $region24
        $region23: #{tpu_custom_call.1} parent=11 // pred_region
          %s309 = ssub.s32 2048, 2048
          %310 = vsyncadd [#allocation6], %s309
          %s311 = sshll.u32 [#allocation7], 4
          %s312 = int_to_ptr.vmem [resolvable:$true] %s311
          %317 = dma.hbm_to_vmem [thread:$0]  %s3, 2048, %s312, [#allocation6], 64, 64, 4
        $region24: #{tpu_custom_call.1} parent=11 // pred_fallthru
          _
        // Predicated region
        $region25: #{tpu_custom_call.1} parent=11 // pred_check
          %p318 = pneg %p138
        $region26: #{tpu_custom_call.1} parent=11 // pred_check_branch
          %320 = sbr.rel (%p318) target = $region28
        $region27: #{tpu_custom_call.1} parent=11 // pred_region
          _
        $region28: #{tpu_custom_call.1} parent=11 // pred_fallthru
          _
        // Predicated region
        $region29: #{tpu_custom_call.1} parent=11 // pred_check
          %p321 = pneg %p159
        $region30: #{tpu_custom_call.1} parent=11 // pred_check_branch
          %323 = sbr.rel (%p321) target = $region32
        $region31: #{tpu_custom_call.1} parent=11 // pred_region
          %s325 = ssub.s32 2048, 2048
          %326 = vsyncadd [#allocation9], %s325
          %s327 = sshll.u32 [#allocation8], 4
          %s328 = int_to_ptr.vmem [resolvable:$true] %s327
          %333 = dma.hbm_to_vmem [thread:$0]  %s5, 2048, %s328, [#allocation9], 128, 128, 8
        $region32: #{tpu_custom_call.1} parent=11 // pred_fallthru
          _
        // Predicated region
        $region33: #{tpu_custom_call.1} parent=11 // pred_check
          %p334 = pneg %p180
        $region34: #{tpu_custom_call.1} parent=11 // pred_check_branch
          %336 = sbr.rel (%p334) target = $region36
        $region35: #{tpu_custom_call.1} parent=11 // pred_region
          _
        $region36: #{tpu_custom_call.1} parent=11 // pred_fallthru
          _
        // Predicated region
        $region37: #{tpu_custom_call.1} parent=11 // pred_check
          %p337 = pneg %p201
        $region38: #{tpu_custom_call.1} parent=11 // pred_check_branch
          %339 = sbr.rel (%p337) target = $region40
        $region39: #{tpu_custom_call.1} parent=11 // pred_region
          %s341 = ssub.s32 2048, 2048
          %342 = vsyncadd [#allocation9], %s341
          %s343 = sshll.u32 [#allocation10], 4
          %s344 = int_to_ptr.vmem [resolvable:$true] %s343
          %349 = dma.hbm_to_vmem [thread:$0]  %s7, 2048, %s344, [#allocation9], 64, 64, 4
        $region40: #{tpu_custom_call.1} parent=11 // pred_fallthru
          _
        // Predicated region
        $region41: #{tpu_custom_call.1} parent=11 // pred_check
          %p350 = pneg %p222
        $region42: #{tpu_custom_call.1} parent=11 // pred_check_branch
          %352 = sbr.rel (%p350) target = $region44
        $region43: #{tpu_custom_call.1} parent=11 // pred_region
          _
        $region44: #{tpu_custom_call.1} parent=11 // pred_fallthru
          _
      $region12: #{tpu_custom_call.1} parent=5 // pred_fallthru
        _
      %p353 = scmp.lt.s32.totalorder %s28, 4
      // Predicated region
      $region45: #{tpu_custom_call.1} parent=5 // pred_check
        %p354 = pneg %p353
      $region46: #{tpu_custom_call.1} parent=5 // pred_check_branch
        %356 = sbr.rel (%p354) target = $region48
      $region47: #{tpu_custom_call.1} parent=5 // pred_region
        // Predicated region
        $region49: #{tpu_custom_call.1} parent=47 // pred_check
          %p357 = pneg %p48
        $region50: #{tpu_custom_call.1} parent=47 // pred_check_branch
          %359 = sbr.rel (%p357) target = $region52
        $region51: #{tpu_custom_call.1} parent=47 // pred_region
          %s360 = sand.u32 %s38, 1
          %s361 = scalar_lea.sflag [#allocation3], %s360
          %s362 = sand.u32 %s38, 1
          %s363 = smul.addr %s362, 64
          %s364 = scalar_lea.vmem [#allocation2], %s363
          %s365 = smul.u32 16, %s28
          %s367 = ssub.s32 1024, 1024
          %368 = vsyncadd %s361, %s367
          %s369 = smul.addr %s365, 64
          %s370 = scalar_lea.hbm %s0, %s369
          %s371 = sshll.u32 %s364, 4
          %s372 = int_to_ptr.vmem [resolvable:$true] %s371
          %377 = dma.hbm_to_vmem [thread:$0]  %s370, 1024, %s372, %s361, 64, 64, 4
        $region52: #{tpu_custom_call.1} parent=47 // pred_fallthru
          _
      $region48: #{tpu_custom_call.1} parent=5 // pred_fallthru
        _
      %p378 = scmp.le.s32.totalorder 1, %s28
      %p379 = scmp.lt.s32.totalorder %s28, 5
      %p380 = pnand %p378, %p379
      %p381 = pneg %p380
      // Predicated region
      $region53: #{tpu_custom_call.1} parent=5 // pred_check
        _
      $region54: #{tpu_custom_call.1} parent=5 // pred_check_branch
        %383 = sbr.rel (%p380) target = $region56
      $region55: #{tpu_custom_call.1} parent=5 // pred_region
        %s384 = ssub.s32 %s28, 1
        %s385 = sand.u32 %s41, 1
        %s386 = scalar_lea.sflag [#allocation3], %s385
        %s387 = sand.u32 %s41, 1
        %s388 = smul.addr %s387, 64
        %s389 = scalar_lea.vmem [#allocation2], %s388
        // Predicated region
        $region57: #{tpu_custom_call.1} parent=55 // pred_check
          %p390 = pneg %p54
        $region58: #{tpu_custom_call.1} parent=55 // pred_check_branch
          %392 = sbr.rel (%p390) target = $region60
        $region59: #{tpu_custom_call.1} parent=55 // pred_region
          %393 = dma.done %s386, 1024
        $region60: #{tpu_custom_call.1} parent=55 // pred_fallthru
          _
        // Predicated region
        $region61: #{tpu_custom_call.1} parent=55 // pred_check
          %p394 = pneg %p75
        $region62: #{tpu_custom_call.1} parent=55 // pred_check_branch
          %396 = sbr.rel (%p394) target = $region64
        $region63: #{tpu_custom_call.1} parent=55 // pred_region
          %397 = dma.done [#allocation6], 2048
        $region64: #{tpu_custom_call.1} parent=55 // pred_fallthru
          _
        // Predicated region
        $region65: #{tpu_custom_call.1} parent=55 // pred_check
          %p398 = pneg %p117
        $region66: #{tpu_custom_call.1} parent=55 // pred_check_branch
          %400 = sbr.rel (%p398) target = $region68
        $region67: #{tpu_custom_call.1} parent=55 // pred_region
          %401 = dma.done [#allocation6], 2048
        $region68: #{tpu_custom_call.1} parent=55 // pred_fallthru
          _
        // Predicated region
        $region69: #{tpu_custom_call.1} parent=55 // pred_check
          %p402 = pneg %p159
        $region70: #{tpu_custom_call.1} parent=55 // pred_check_branch
          %404 = sbr.rel (%p402) target = $region72
        $region71: #{tpu_custom_call.1} parent=55 // pred_region
          %405 = dma.done [#allocation9], 2048
        $region72: #{tpu_custom_call.1} parent=55 // pred_fallthru
          _
        // Predicated region
        $region73: #{tpu_custom_call.1} parent=55 // pred_check
          %p406 = pneg %p201
        $region74: #{tpu_custom_call.1} parent=55 // pred_check_branch
          %408 = sbr.rel (%p406) target = $region76
        $region75: #{tpu_custom_call.1} parent=55 // pred_region
          %409 = dma.done [#allocation9], 2048
        $region76: #{tpu_custom_call.1} parent=55 // pred_fallthru
          _
        %s410 = sand.u32 %s41, 1
        %s411 = scalar_lea.sflag [#allocation3], %s410
        %s412 = sand.u32 %s41, 1
        %s413 = smul.addr %s412, 64
        %s414 = scalar_lea.vmem [#allocation2], %s413
        %p415 = pneg %p54
        %p416 = pneg %p51
        %p417 = pneg %p75
        %p418 = pneg %p72
        %p419 = pneg %p96
        %p420 = pneg %p93
        %p421 = pneg %p117
        %p422 = pneg %p114
        %p423 = pneg %p138
        %p424 = pneg %p135
        %p425 = pneg %p159
        %p426 = pneg %p156
        %p427 = pneg %p180
        %p428 = pneg %p177
        %p429 = pneg %p201
        %p430 = pneg %p198
        %p431 = pneg %p222
        %p432 = pneg %p219
        %p433 = pneg %p248
        %p434 = pneg %p245
        %s435 = sand.u32 %s235, 1
        %s436 = scalar_lea.sflag [#allocation4], %s435
        %s437 = sand.u32 %s235, 1
        %s438 = smul.addr %s437, 128
        %s439 = scalar_lea.vmem [#allocation11], %s438
        %p440 = pneg %p274
        %p441 = pneg %p271
        %s442 = sand.u32 %s261, 1
        %s443 = scalar_lea.sflag [#allocation13], %s442
        %s444 = sand.u32 %s261, 1
        %s445 = smul.addr %s444, 128
        %s446 = scalar_lea.vmem [#allocation12], %s445
        %s447 = smul.u32 16, %s33
        %s448 = smul.u32 16, %s33
        %s449 = smul.u32 16, %s33
        %v451 = vld [vmem:[%s389] sm:$0xf]
        %v452 = vld [vmem:[%s389 + $0x4] sm:$0xf]
        %v453 = vld [vmem:[%s389 + $0x8] sm:$0xf]
        %v454 = vld [vmem:[%s389 + $0xc] sm:$0xf]
        %v455 = vld [vmem:[%s389 + $0x10] sm:$0xf]
        %v456 = vld [vmem:[%s389 + $0x14] sm:$0xf]
        %v457 = vld [vmem:[%s389 + $0x18] sm:$0xf]
        %v458 = vld [vmem:[%s389 + $0x1c] sm:$0xf]
        %v459 = vld [vmem:[%s389 + $0x20] sm:$0xf]
        %v460 = vld [vmem:[%s389 + $0x24] sm:$0xf]
        %v461 = vld [vmem:[%s389 + $0x28] sm:$0xf]
        %v462 = vld [vmem:[%s389 + $0x2c] sm:$0xf]
        %v463 = vld [vmem:[%s389 + $0x30] sm:$0xf]
        %v464 = vld [vmem:[%s389 + $0x34] sm:$0xf]
        %v465 = vld [vmem:[%s389 + $0x38] sm:$0xf]
        %v466 = vld [vmem:[%s389 + $0x3c] sm:$0xf]
        %v467 = vld [vmem:[#allocation5] sm:$0xff]
        %v468 = vld [vmem:[#allocation5 + $0x8] sm:$0xff]
        %v469 = vld [vmem:[#allocation5 + $0x10] sm:$0xff]
        %v470 = vld [vmem:[#allocation5 + $0x18] sm:$0xff]
        %v471 = vld [vmem:[#allocation5 + $0x20] sm:$0xff]
        %v472 = vld [vmem:[#allocation5 + $0x28] sm:$0xff]
        %v473 = vld [vmem:[#allocation5 + $0x30] sm:$0xff]
        %v474 = vld [vmem:[#allocation5 + $0x38] sm:$0xff]
        %v475 = vld [vmem:[#allocation5 + $0x40] sm:$0xff]
        %v476 = vld [vmem:[#allocation5 + $0x48] sm:$0xff]
        %v477 = vld [vmem:[#allocation5 + $0x50] sm:$0xff]
        %v478 = vld [vmem:[#allocation5 + $0x58] sm:$0xff]
        %v479 = vld [vmem:[#allocation5 + $0x60] sm:$0xff]
        %v480 = vld [vmem:[#allocation5 + $0x68] sm:$0xff]
        %v481 = vld [vmem:[#allocation5 + $0x70] sm:$0xff]
        %v482 = vld [vmem:[#allocation5 + $0x78] sm:$0xff]
        %v483 = vld [vmem:[%s2] sm:$0x3]
        %v485 = vlaneseq
        %v486 = vshrl.u32 %v485, 7
        %v487 = vsub.s32 0, %v486
        %v488 = vrot.slane %v483, %v487
        %v489 = vlaneseq
        %v490 = vshrl.u32 %v489, 7
        %v491 = vsub.s32 1, %v490
        %v492 = vrot.slane %v483, %v491
        %v511 = vunpack.c.l.b16 %v451
        %v512 = vunpack.c.l.b16 %v452
        %v513 = vunpack.c.l.b16 %v453
        %v514 = vunpack.c.l.b16 %v454
        %v515 = vunpack.c.l.b16 %v455
        %v516 = vunpack.c.l.b16 %v456
        %v517 = vunpack.c.l.b16 %v457
        %v518 = vunpack.c.l.b16 %v458
        %v519 = vunpack.c.l.b16 %v459
        %v520 = vunpack.c.l.b16 %v460
        %v521 = vunpack.c.l.b16 %v461
        %v522 = vunpack.c.l.b16 %v462
        %v523 = vunpack.c.l.b16 %v463
        %v524 = vunpack.c.l.b16 %v464
        %v525 = vunpack.c.l.b16 %v465
        %v526 = vunpack.c.l.b16 %v466
        %v527 = vpack.c.b16 %v512, %v511
        %v528 = vpack.c.b16 %v514, %v513
        %v529 = vpack.c.b16 %v516, %v515
        %v530 = vpack.c.b16 %v518, %v517
        %v531 = vpack.c.b16 %v520, %v519
        %v532 = vpack.c.b16 %v522, %v521
        %v533 = vpack.c.b16 %v524, %v523
        %v534 = vpack.c.b16 %v526, %v525
        %v559 = vunpack.c.l.b16 %v467
        %v560 = vunpack.c.h.b16 %v467
        %v561 = vunpack.c.l.b16 %v468
        %v562 = vunpack.c.h.b16 %v468
        %v563 = vunpack.c.l.b16 %v469
        %v564 = vunpack.c.h.b16 %v469
        %v565 = vunpack.c.l.b16 %v470
        %v566 = vunpack.c.h.b16 %v470
        %v567 = vunpack.c.l.b16 %v471
        %v568 = vunpack.c.h.b16 %v471
        %v569 = vunpack.c.l.b16 %v472
        %v570 = vunpack.c.h.b16 %v472
        %v571 = vunpack.c.l.b16 %v473
        %v572 = vunpack.c.h.b16 %v473
        %v573 = vunpack.c.l.b16 %v474
        %v574 = vunpack.c.h.b16 %v474
        %v575 = vunpack.c.l.b16 %v475
        %v576 = vunpack.c.h.b16 %v475
        %v577 = vunpack.c.l.b16 %v476
        %v578 = vunpack.c.h.b16 %v476
        %v579 = vunpack.c.l.b16 %v477
        %v580 = vunpack.c.h.b16 %v477
        %v581 = vunpack.c.l.b16 %v478
        %v582 = vunpack.c.h.b16 %v478
        %v583 = vunpack.c.l.b16 %v479
        %v584 = vunpack.c.h.b16 %v479
        %v585 = vunpack.c.l.b16 %v480
        %v586 = vunpack.c.h.b16 %v480
        %v587 = vunpack.c.l.b16 %v481
        %v588 = vunpack.c.h.b16 %v481
        %v589 = vunpack.c.l.b16 %v482
        %v590 = vunpack.c.h.b16 %v482
        %v591 = vpack.c.b16 %v561, %v559
        %v592 = vpack.c.b16 %v562, %v560
        %v593 = vpack.c.b16 %v565, %v563
        %v594 = vpack.c.b16 %v566, %v564
        %v595 = vpack.c.b16 %v569, %v567
        %v596 = vpack.c.b16 %v570, %v568
        %v597 = vpack.c.b16 %v573, %v571
        %v598 = vpack.c.b16 %v574, %v572
        %v599 = vpack.c.b16 %v577, %v575
        %v600 = vpack.c.b16 %v578, %v576
        %v601 = vpack.c.b16 %v581, %v579
        %v602 = vpack.c.b16 %v582, %v580
        %v603 = vpack.c.b16 %v585, %v583
        %v604 = vpack.c.b16 %v586, %v584
        %v605 = vpack.c.b16 %v589, %v587
        %v606 = vpack.c.b16 %v590, %v588
        %623 = vmatprep.subr.bf16.mxu0 %v592
        %624 = vmatpush1.bf16.msra.mxu0 %v591
        %625 = vmatprep.subr.bf16.mxu0 %v594
        %626 = vmatpush1.bf16.msra.mxu0 %v593
        %627 = vmatprep.subr.bf16.mxu0 %v596
        %628 = vmatpush1.bf16.msra.mxu0 %v595
        %629 = vmatprep.subr.bf16.mxu0 %v598
        %630 = vmatpush1.bf16.msra.mxu0 %v597
        %631 = vmatprep.subr.bf16.mxu0 %v600
        %632 = vmatpush1.bf16.msra.mxu0 %v599
        %633 = vmatprep.subr.bf16.mxu0 %v602
        %634 = vmatpush1.bf16.msra.mxu0 %v601
        %635 = vmatprep.subr.bf16.mxu0 %v604
        %636 = vmatpush1.bf16.msra.mxu0 %v603
        %637 = vmatprep.subr.bf16.mxu0 %v606
        %638 = vmatpush1.bf16.msra.mxu0 %v605
        %639 = vmatprep.subr.bf16.mxu0 0
        %640 = vmatpush1.bf16.msra.mxu0 0
        %641 = vmatprep.subr.bf16.mxu0 0
        %642 = vmatpush1.bf16.msra.mxu0 0
        %643 = vmatprep.subr.bf16.mxu0 0
        %644 = vmatpush1.bf16.msra.mxu0 0
        %645 = vmatprep.subr.bf16.mxu0 0
        %646 = vmatpush1.bf16.msra.mxu0 0
        %647 = vmatprep.subr.bf16.mxu0 0
        %648 = vmatpush1.bf16.msra.mxu0 0
        %649 = vmatprep.subr.bf16.mxu0 0
        %650 = vmatpush1.bf16.msra.mxu0 0
        %651 = vmatprep.subr.bf16.mxu0 0
        %652 = vmatpush1.bf16.msra.mxu0 0
        %653 = vmatprep.subr.bf16.mxu0 0
        %654 = vmatpush1.bf16.msra.mxu0 0
        %655 = vmatprep.mubr.bf16.mxu0 0
        %656 = vmatmul.mubr.bf16.gmra.mrb[0].mxu0 %v527
        %v657 = vpop.f32.mrb[0].mxu0
        %v658 = vadd.f32 %v488, %v657
        %v659 = vpop.f32.mrb[0].mxu0
        %v660 = vadd.f32 %v492, %v659
        %v661 = vpop.f32.mrb[0].mxu0
        %v662 = vadd.f32 %v488, %v661
        %v663 = vpop.f32.mrb[0].mxu0
        %v664 = vadd.f32 %v492, %v663
        %665 = vmatprep.mubr.bf16.mxu0 0
        %666 = vmatmul.mubr.bf16.gmra.mrb[0].mxu0 %v528
        %v667 = vpop.f32.mrb[0].mxu0
        %v668 = vadd.f32 %v488, %v667
        %v669 = vpop.f32.mrb[0].mxu0
        %v670 = vadd.f32 %v492, %v669
        %v671 = vpop.f32.mrb[0].mxu0
        %v672 = vadd.f32 %v488, %v671
        %v673 = vpop.f32.mrb[0].mxu0
        %v674 = vadd.f32 %v492, %v673
        %675 = vmatprep.mubr.bf16.mxu0 0
        %676 = vmatmul.mubr.bf16.gmra.mrb[0].mxu0 %v529
        %v677 = vpop.f32.mrb[0].mxu0
        %v678 = vadd.f32 %v488, %v677
        %v679 = vpop.f32.mrb[0].mxu0
        %v680 = vadd.f32 %v492, %v679
        %v681 = vpop.f32.mrb[0].mxu0
        %v682 = vadd.f32 %v488, %v681
        %v683 = vpop.f32.mrb[0].mxu0
        %v684 = vadd.f32 %v492, %v683
        %685 = vmatprep.mubr.bf16.mxu0 0
        %686 = vmatmul.mubr.bf16.gmra.mrb[0].mxu0 %v530
        %v687 = vpop.f32.mrb[0].mxu0
        %v688 = vadd.f32 %v488, %v687
        %v689 = vpop.f32.mrb[0].mxu0
        %v690 = vadd.f32 %v492, %v689
        %v691 = vpop.f32.mrb[0].mxu0
        %v692 = vadd.f32 %v488, %v691
        %v693 = vpop.f32.mrb[0].mxu0
        %v694 = vadd.f32 %v492, %v693
        %695 = vmatprep.mubr.bf16.mxu0 0
        %696 = vmatmul.mubr.bf16.gmra.mrb[0].mxu0 %v531
        %v697 = vpop.f32.mrb[0].mxu0
        %v698 = vadd.f32 %v488, %v697
        %v699 = vpop.f32.mrb[0].mxu0
        %v700 = vadd.f32 %v492, %v699
        %v701 = vpop.f32.mrb[0].mxu0
        %v702 = vadd.f32 %v488, %v701
        %v703 = vpop.f32.mrb[0].mxu0
        %v704 = vadd.f32 %v492, %v703
        %705 = vmatprep.mubr.bf16.mxu0 0
        %706 = vmatmul.mubr.bf16.gmra.mrb[0].mxu0 %v532
        %v707 = vpop.f32.mrb[0].mxu0
        %v708 = vadd.f32 %v488, %v707
        %v709 = vpop.f32.mrb[0].mxu0
        %v710 = vadd.f32 %v492, %v709
        %v711 = vpop.f32.mrb[0].mxu0
        %v712 = vadd.f32 %v488, %v711
        %v713 = vpop.f32.mrb[0].mxu0
        %v714 = vadd.f32 %v492, %v713
        %715 = vmatprep.mubr.bf16.mxu0 0
        %716 = vmatmul.mubr.bf16.gmra.mrb[0].mxu0 %v533
        %v717 = vpop.f32.mrb[0].mxu0
        %v718 = vadd.f32 %v488, %v717
        %v719 = vpop.f32.mrb[0].mxu0
        %v720 = vadd.f32 %v492, %v719
        %v721 = vpop.f32.mrb[0].mxu0
        %v722 = vadd.f32 %v488, %v721
        %v723 = vpop.f32.mrb[0].mxu0
        %v724 = vadd.f32 %v492, %v723
        %725 = vmatprep.mubr.bf16.mxu0 0
        %726 = vmatmul.mubr.bf16.gmra.mrb[0].mxu0 %v534
        %v727 = vpop.f32.mrb[0].mxu0
        %v728 = vadd.f32 %v488, %v727
        %v729 = vpop.f32.mrb[0].mxu0
        %v730 = vadd.f32 %v492, %v729
        %v731 = vpop.f32.mrb[0].mxu0
        %v732 = vadd.f32 %v488, %v731
        %v733 = vpop.f32.mrb[0].mxu0
        %v734 = vadd.f32 %v492, %v733
        %735 = vdwg.mxu0
        %v736 = vmax.f32 %v658, 0.0
        %v737 = vmax.f32 %v660, 0.0
        %v738 = vmax.f32 %v662, 0.0
        %v739 = vmax.f32 %v664, 0.0
        %v740 = vmax.f32 %v668, 0.0
        %v741 = vmax.f32 %v670, 0.0
        %v742 = vmax.f32 %v672, 0.0
        %v743 = vmax.f32 %v674, 0.0
        %v744 = vmax.f32 %v678, 0.0
        %v745 = vmax.f32 %v680, 0.0
        %v746 = vmax.f32 %v682, 0.0
        %v747 = vmax.f32 %v684, 0.0
        %v748 = vmax.f32 %v688, 0.0
        %v749 = vmax.f32 %v690, 0.0
        %v750 = vmax.f32 %v692, 0.0
        %v751 = vmax.f32 %v694, 0.0
        %v752 = vmax.f32 %v698, 0.0
        %v753 = vmax.f32 %v700, 0.0
        %v754 = vmax.f32 %v702, 0.0
        %v755 = vmax.f32 %v704, 0.0
        %v756 = vmax.f32 %v708, 0.0
        %v757 = vmax.f32 %v710, 0.0
        %v758 = vmax.f32 %v712, 0.0
        %v759 = vmax.f32 %v714, 0.0
        %v760 = vmax.f32 %v718, 0.0
        %v761 = vmax.f32 %v720, 0.0
        %v762 = vmax.f32 %v722, 0.0
        %v763 = vmax.f32 %v724, 0.0
        %v764 = vmax.f32 %v728, 0.0
        %v765 = vmax.f32 %v730, 0.0
        %v766 = vmax.f32 %v732, 0.0
        %v767 = vmax.f32 %v734, 0.0
        %v768 = vpack.c.bf16 %v738, %v736
        %v769 = vpack.c.bf16 %v739, %v737
        %v770 = vpack.c.bf16 %v742, %v740
        %v771 = vpack.c.bf16 %v743, %v741
        %v772 = vpack.c.bf16 %v746, %v744
        %v773 = vpack.c.bf16 %v747, %v745
        %v774 = vpack.c.bf16 %v750, %v748
        %v775 = vpack.c.bf16 %v751, %v749
        %v776 = vpack.c.bf16 %v754, %v752
        %v777 = vpack.c.bf16 %v755, %v753
        %v778 = vpack.c.bf16 %v758, %v756
        %v779 = vpack.c.bf16 %v759, %v757
        %v780 = vpack.c.bf16 %v762, %v760
        %v781 = vpack.c.bf16 %v763, %v761
        %v782 = vpack.c.bf16 %v766, %v764
        %v783 = vpack.c.bf16 %v767, %v765
        %v784 = vld [vmem:[#allocation7] sm:$0xf]
        %v785 = vld [vmem:[#allocation7 + $0x4] sm:$0xf]
        %v786 = vld [vmem:[#allocation7 + $0x8] sm:$0xf]
        %v787 = vld [vmem:[#allocation7 + $0xc] sm:$0xf]
        %v788 = vld [vmem:[#allocation7 + $0x10] sm:$0xf]
        %v789 = vld [vmem:[#allocation7 + $0x14] sm:$0xf]
        %v790 = vld [vmem:[#allocation7 + $0x18] sm:$0xf]
        %v791 = vld [vmem:[#allocation7 + $0x1c] sm:$0xf]
        %v792 = vld [vmem:[#allocation7 + $0x20] sm:$0xf]
        %v793 = vld [vmem:[#allocation7 + $0x24] sm:$0xf]
        %v794 = vld [vmem:[#allocation7 + $0x28] sm:$0xf]
        %v795 = vld [vmem:[#allocation7 + $0x2c] sm:$0xf]
        %v796 = vld [vmem:[#allocation7 + $0x30] sm:$0xf]
        %v797 = vld [vmem:[#allocation7 + $0x34] sm:$0xf]
        %v798 = vld [vmem:[#allocation7 + $0x38] sm:$0xf]
        %v799 = vld [vmem:[#allocation7 + $0x3c] sm:$0xf]
        %v800 = vld [vmem:[#allocation7 + $0x40] sm:$0xf]
        %v801 = vld [vmem:[#allocation7 + $0x44] sm:$0xf]
        %v802 = vld [vmem:[#allocation7 + $0x48] sm:$0xf]
        %v803 = vld [vmem:[#allocation7 + $0x4c] sm:$0xf]
        %v804 = vld [vmem:[#allocation7 + $0x50] sm:$0xf]
        %v805 = vld [vmem:[#allocation7 + $0x54] sm:$0xf]
        %v806 = vld [vmem:[#allocation7 + $0x58] sm:$0xf]
        %v807 = vld [vmem:[#allocation7 + $0x5c] sm:$0xf]
        %v808 = vld [vmem:[#allocation7 + $0x60] sm:$0xf]
        %v809 = vld [vmem:[#allocation7 + $0x64] sm:$0xf]
        %v810 = vld [vmem:[#allocation7 + $0x68] sm:$0xf]
        %v811 = vld [vmem:[#allocation7 + $0x6c] sm:$0xf]
        %v812 = vld [vmem:[#allocation7 + $0x70] sm:$0xf]
        %v813 = vld [vmem:[#allocation7 + $0x74] sm:$0xf]
        %v814 = vld [vmem:[#allocation7 + $0x78] sm:$0xf]
        %v815 = vld [vmem:[#allocation7 + $0x7c] sm:$0xf]
        %v816 = vld [vmem:[%s4] sm:$0x1]
        %v818 = vlaneseq
        %v819 = vshrl.u32 %v818, 7
        %v820 = vsub.s32 0, %v819
        %v821 = vrot.slane %v816, %v820
        %v855 = vunpack.c.l.b16 %v784
        %v856 = vunpack.c.l.b16 %v785
        %v857 = vunpack.c.l.b16 %v786
        %v858 = vunpack.c.l.b16 %v787
        %v859 = vunpack.c.l.b16 %v788
        %v860 = vunpack.c.l.b16 %v789
        %v861 = vunpack.c.l.b16 %v790
        %v862 = vunpack.c.l.b16 %v791
        %v863 = vunpack.c.l.b16 %v792
        %v864 = vunpack.c.l.b16 %v793
        %v865 = vunpack.c.l.b16 %v794
        %v866 = vunpack.c.l.b16 %v795
        %v867 = vunpack.c.l.b16 %v796
        %v868 = vunpack.c.l.b16 %v797
        %v869 = vunpack.c.l.b16 %v798
        %v870 = vunpack.c.l.b16 %v799
        %v871 = vunpack.c.l.b16 %v800
        %v872 = vunpack.c.l.b16 %v801
        %v873 = vunpack.c.l.b16 %v802
        %v874 = vunpack.c.l.b16 %v803
        %v875 = vunpack.c.l.b16 %v804
        %v876 = vunpack.c.l.b16 %v805
        %v877 = vunpack.c.l.b16 %v806
        %v878 = vunpack.c.l.b16 %v807
        %v879 = vunpack.c.l.b16 %v808
        %v880 = vunpack.c.l.b16 %v809
        %v881 = vunpack.c.l.b16 %v810
        %v882 = vunpack.c.l.b16 %v811
        %v883 = vunpack.c.l.b16 %v812
        %v884 = vunpack.c.l.b16 %v813
        %v885 = vunpack.c.l.b16 %v814
        %v886 = vunpack.c.l.b16 %v815
        %v887 = vpack.c.b16 %v856, %v855
        %v888 = vpack.c.b16 %v858, %v857
        %v889 = vpack.c.b16 %v860, %v859
        %v890 = vpack.c.b16 %v862, %v861
        %v891 = vpack.c.b16 %v864, %v863
        %v892 = vpack.c.b16 %v866, %v865
        %v893 = vpack.c.b16 %v868, %v867
        %v894 = vpack.c.b16 %v870, %v869
        %v895 = vpack.c.b16 %v872, %v871
        %v896 = vpack.c.b16 %v874, %v873
        %v897 = vpack.c.b16 %v876, %v875
        %v898 = vpack.c.b16 %v878, %v877
        %v899 = vpack.c.b16 %v880, %v879
        %v900 = vpack.c.b16 %v882, %v881
        %v901 = vpack.c.b16 %v884, %v883
        %v902 = vpack.c.b16 %v886, %v885
        %919 = vmatprep.subr.bf16.mxu0 0
        %920 = vmatpush1.bf16.msra.mxu0 %v887
        %921 = vmatprep.subr.bf16.mxu0 0
        %922 = vmatpush1.bf16.msra.mxu0 %v888
        %923 = vmatprep.subr.bf16.mxu0 0
        %924 = vmatpush1.bf16.msra.mxu0 %v889
        %925 = vmatprep.subr.bf16.mxu0 0
        %926 = vmatpush1.bf16.msra.mxu0 %v890
        %927 = vmatprep.subr.bf16.mxu0 0
        %928 = vmatpush1.bf16.msra.mxu0 %v891
        %929 = vmatprep.subr.bf16.mxu0 0
        %930 = vmatpush1.bf16.msra.mxu0 %v892
        %931 = vmatprep.subr.bf16.mxu0 0
        %932 = vmatpush1.bf16.msra.mxu0 %v893
        %933 = vmatprep.subr.bf16.mxu0 0
        %934 = vmatpush1.bf16.msra.mxu0 %v894
        %935 = vmatprep.subr.bf16.mxu0 0
        %936 = vmatpush1.bf16.msra.mxu0 %v895
        %937 = vmatprep.subr.bf16.mxu0 0
        %938 = vmatpush1.bf16.msra.mxu0 %v896
        %939 = vmatprep.subr.bf16.mxu0 0
        %940 = vmatpush1.bf16.msra.mxu0 %v897
        %941 = vmatprep.subr.bf16.mxu0 0
        %942 = vmatpush1.bf16.msra.mxu0 %v898
        %943 = vmatprep.subr.bf16.mxu0 0
        %944 = vmatpush1.bf16.msra.mxu0 %v899
        %945 = vmatprep.subr.bf16.mxu0 0
        %946 = vmatpush1.bf16.msra.mxu0 %v900
        %947 = vmatprep.subr.bf16.mxu0 0
        %948 = vmatpush1.bf16.msra.mxu0 %v901
        %949 = vmatprep.subr.bf16.mxu0 0
        %950 = vmatpush1.bf16.msra.mxu0 %v902
        %951 = vmatprep.mubr.bf16.mxu0 %v769
        %952 = vmatmul.mubr.bf16.gmra.mrb[0].mxu0 %v768
        %v953 = vpop.f32.mrb[0].mxu0
        %v954 = vadd.f32 %v821, %v953
        %v955 = vpop.f32.mrb[0].mxu0
        %v956 = vpop.f32.mrb[0].mxu0
        %v957 = vadd.f32 %v821, %v956
        %v958 = vpop.f32.mrb[0].mxu0
        %959 = vmatprep.mubr.bf16.mxu0 %v771
        %960 = vmatmul.mubr.bf16.gmra.mrb[0].mxu0 %v770
        %v961 = vpop.f32.mrb[0].mxu0
        %v962 = vadd.f32 %v821, %v961
        %v963 = vpop.f32.mrb[0].mxu0
        %v964 = vpop.f32.mrb[0].mxu0
        %v965 = vadd.f32 %v821, %v964
        %v966 = vpop.f32.mrb[0].mxu0
        %967 = vmatprep.mubr.bf16.mxu0 %v773
        %968 = vmatmul.mubr.bf16.gmra.mrb[0].mxu0 %v772
        %v969 = vpop.f32.mrb[0].mxu0
        %v970 = vadd.f32 %v821, %v969
        %v971 = vpop.f32.mrb[0].mxu0
        %v972 = vpop.f32.mrb[0].mxu0
        %v973 = vadd.f32 %v821, %v972
        %v974 = vpop.f32.mrb[0].mxu0
        %975 = vmatprep.mubr.bf16.mxu0 %v775
        %976 = vmatmul.mubr.bf16.gmra.mrb[0].mxu0 %v774
        %v977 = vpop.f32.mrb[0].mxu0
        %v978 = vadd.f32 %v821, %v977
        %v979 = vpop.f32.mrb[0].mxu0
        %v980 = vpop.f32.mrb[0].mxu0
        %v981 = vadd.f32 %v821, %v980
        %v982 = vpop.f32.mrb[0].mxu0
        %983 = vmatprep.mubr.bf16.mxu0 %v777
        %984 = vmatmul.mubr.bf16.gmra.mrb[0].mxu0 %v776
        %v985 = vpop.f32.mrb[0].mxu0
        %v986 = vadd.f32 %v821, %v985
        %v987 = vpop.f32.mrb[0].mxu0
        %v988 = vpop.f32.mrb[0].mxu0
        %v989 = vadd.f32 %v821, %v988
        %v990 = vpop.f32.mrb[0].mxu0
        %991 = vmatprep.mubr.bf16.mxu0 %v779
        %992 = vmatmul.mubr.bf16.gmra.mrb[0].mxu0 %v778
        %v993 = vpop.f32.mrb[0].mxu0
        %v994 = vadd.f32 %v821, %v993
        %v995 = vpop.f32.mrb[0].mxu0
        %v996 = vpop.f32.mrb[0].mxu0
        %v997 = vadd.f32 %v821, %v996
        %v998 = vpop.f32.mrb[0].mxu0
        %999 = vmatprep.mubr.bf16.mxu0 %v781
        %1000 = vmatmul.mubr.bf16.gmra.mrb[0].mxu0 %v780
        %v1001 = vpop.f32.mrb[0].mxu0
        %v1002 = vadd.f32 %v821, %v1001
        %v1003 = vpop.f32.mrb[0].mxu0
        %v1004 = vpop.f32.mrb[0].mxu0
        %v1005 = vadd.f32 %v821, %v1004
        %v1006 = vpop.f32.mrb[0].mxu0
        %1007 = vmatprep.mubr.bf16.mxu0 %v783
        %1008 = vmatmul.mubr.bf16.gmra.mrb[0].mxu0 %v782
        %v1009 = vpop.f32.mrb[0].mxu0
        %v1010 = vadd.f32 %v821, %v1009
        %v1011 = vpop.f32.mrb[0].mxu0
        %v1012 = vpop.f32.mrb[0].mxu0
        %v1013 = vadd.f32 %v821, %v1012
        %v1014 = vpop.f32.mrb[0].mxu0
        %1015 = vdwg.mxu0
        %v1016 = vpack.c.bf16 %v957, %v954
        %v1017 = vpack.c.bf16 %v965, %v962
        %v1018 = vpack.c.bf16 %v973, %v970
        %v1019 = vpack.c.bf16 %v981, %v978
        %v1020 = vpack.c.bf16 %v989, %v986
        %v1021 = vpack.c.bf16 %v997, %v994
        %v1022 = vpack.c.bf16 %v1005, %v1002
        %v1023 = vpack.c.bf16 %v1013, %v1010
        %v1024 = vld [vmem:[#allocation8] sm:$0xff]
        %v1025 = vld [vmem:[#allocation8 + $0x8] sm:$0xff]
        %v1026 = vld [vmem:[#allocation8 + $0x10] sm:$0xff]
        %v1027 = vld [vmem:[#allocation8 + $0x18] sm:$0xff]
        %v1028 = vld [vmem:[#allocation8 + $0x20] sm:$0xff]
        %v1029 = vld [vmem:[#allocation8 + $0x28] sm:$0xff]
        %v1030 = vld [vmem:[#allocation8 + $0x30] sm:$0xff]
        %v1031 = vld [vmem:[#allocation8 + $0x38] sm:$0xff]
        %v1032 = vld [vmem:[#allocation8 + $0x40] sm:$0xff]
        %v1033 = vld [vmem:[#allocation8 + $0x48] sm:$0xff]
        %v1034 = vld [vmem:[#allocation8 + $0x50] sm:$0xff]
        %v1035 = vld [vmem:[#allocation8 + $0x58] sm:$0xff]
        %v1036 = vld [vmem:[#allocation8 + $0x60] sm:$0xff]
        %v1037 = vld [vmem:[#allocation8 + $0x68] sm:$0xff]
        %v1038 = vld [vmem:[#allocation8 + $0x70] sm:$0xff]
        %v1039 = vld [vmem:[#allocation8 + $0x78] sm:$0xff]
        %v1040 = vld [vmem:[%s6] sm:$0x3]
        %v1042 = vlaneseq
        %v1043 = vshrl.u32 %v1042, 7
        %v1044 = vsub.s32 0, %v1043
        %v1045 = vrot.slane %v1040, %v1044
        %v1046 = vlaneseq
        %v1047 = vshrl.u32 %v1046, 7
        %v1048 = vsub.s32 1, %v1047
        %v1049 = vrot.slane %v1040, %v1048
        %v1068 = vunpack.c.l.b16 %v1024
        %v1069 = vunpack.c.h.b16 %v1024
        %v1070 = vunpack.c.l.b16 %v1025
        %v1071 = vunpack.c.h.b16 %v1025
        %v1072 = vunpack.c.l.b16 %v1026
        %v1073 = vunpack.c.h.b16 %v1026
        %v1074 = vunpack.c.l.b16 %v1027
        %v1075 = vunpack.c.h.b16 %v1027
        %v1076 = vunpack.c.l.b16 %v1028
        %v1077 = vunpack.c.h.b16 %v1028
        %v1078 = vunpack.c.l.b16 %v1029
        %v1079 = vunpack.c.h.b16 %v1029
        %v1080 = vunpack.c.l.b16 %v1030
        %v1081 = vunpack.c.h.b16 %v1030
        %v1082 = vunpack.c.l.b16 %v1031
        %v1083 = vunpack.c.h.b16 %v1031
        %v1084 = vunpack.c.l.b16 %v1032
        %v1085 = vunpack.c.h.b16 %v1032
        %v1086 = vunpack.c.l.b16 %v1033
        %v1087 = vunpack.c.h.b16 %v1033
        %v1088 = vunpack.c.l.b16 %v1034
        %v1089 = vunpack.c.h.b16 %v1034
        %v1090 = vunpack.c.l.b16 %v1035
        %v1091 = vunpack.c.h.b16 %v1035
        %v1092 = vunpack.c.l.b16 %v1036
        %v1093 = vunpack.c.h.b16 %v1036
        %v1094 = vunpack.c.l.b16 %v1037
        %v1095 = vunpack.c.h.b16 %v1037
        %v1096 = vunpack.c.l.b16 %v1038
        %v1097 = vunpack.c.h.b16 %v1038
        %v1098 = vunpack.c.l.b16 %v1039
        %v1099 = vunpack.c.h.b16 %v1039
        %v1100 = vpack.c.b16 %v1070, %v1068
        %v1101 = vpack.c.b16 %v1071, %v1069
        %v1102 = vpack.c.b16 %v1074, %v1072
        %v1103 = vpack.c.b16 %v1075, %v1073
        %v1104 = vpack.c.b16 %v1078, %v1076
        %v1105 = vpack.c.b16 %v1079, %v1077
        %v1106 = vpack.c.b16 %v1082, %v1080
        %v1107 = vpack.c.b16 %v1083, %v1081
        %v1108 = vpack.c.b16 %v1086, %v1084
        %v1109 = vpack.c.b16 %v1087, %v1085
        %v1110 = vpack.c.b16 %v1090, %v1088
        %v1111 = vpack.c.b16 %v1091, %v1089
        %v1112 = vpack.c.b16 %v1094, %v1092
        %v1113 = vpack.c.b16 %v1095, %v1093
        %v1114 = vpack.c.b16 %v1098, %v1096
        %v1115 = vpack.c.b16 %v1099, %v1097
        %1132 = vmatprep.subr.bf16.mxu0 %v1101
        %1133 = vmatpush1.bf16.msra.mxu0 %v1100
        %1134 = vmatprep.subr.bf16.mxu0 %v1103
        %1135 = vmatpush1.bf16.msra.mxu0 %v1102
        %1136 = vmatprep.subr.bf16.mxu0 %v1105
        %1137 = vmatpush1.bf16.msra.mxu0 %v1104
        %1138 = vmatprep.subr.bf16.mxu0 %v1107
        %1139 = vmatpush1.bf16.msra.mxu0 %v1106
        %1140 = vmatprep.subr.bf16.mxu0 %v1109
        %1141 = vmatpush1.bf16.msra.mxu0 %v1108
        %1142 = vmatprep.subr.bf16.mxu0 %v1111
        %1143 = vmatpush1.bf16.msra.mxu0 %v1110
        %1144 = vmatprep.subr.bf16.mxu0 %v1113
        %1145 = vmatpush1.bf16.msra.mxu0 %v1112
        %1146 = vmatprep.subr.bf16.mxu0 %v1115
        %1147 = vmatpush1.bf16.msra.mxu0 %v1114
        %1148 = vmatprep.subr.bf16.mxu0 0
        %1149 = vmatpush1.bf16.msra.mxu0 0
        %1150 = vmatprep.subr.bf16.mxu0 0
        %1151 = vmatpush1.bf16.msra.mxu0 0
        %1152 = vmatprep.subr.bf16.mxu0 0
        %1153 = vmatpush1.bf16.msra.mxu0 0
        %1154 = vmatprep.subr.bf16.mxu0 0
        %1155 = vmatpush1.bf16.msra.mxu0 0
        %1156 = vmatprep.subr.bf16.mxu0 0
        %1157 = vmatpush1.bf16.msra.mxu0 0
        %1158 = vmatprep.subr.bf16.mxu0 0
        %1159 = vmatpush1.bf16.msra.mxu0 0
        %1160 = vmatprep.subr.bf16.mxu0 0
        %1161 = vmatpush1.bf16.msra.mxu0 0
        %1162 = vmatprep.subr.bf16.mxu0 0
        %1163 = vmatpush1.bf16.msra.mxu0 0
        %1164 = vmatprep.mubr.bf16.mxu0 0
        %1165 = vmatmul.mubr.bf16.gmra.mrb[0].mxu0 %v1016
        %v1166 = vpop.f32.mrb[0].mxu0
        %v1167 = vadd.f32 %v1045, %v1166
        %v1168 = vpop.f32.mrb[0].mxu0
        %v1169 = vadd.f32 %v1049, %v1168
        %v1170 = vpop.f32.mrb[0].mxu0
        %v1171 = vadd.f32 %v1045, %v1170
        %v1172 = vpop.f32.mrb[0].mxu0
        %v1173 = vadd.f32 %v1049, %v1172
        %1174 = vmatprep.mubr.bf16.mxu0 0
        %1175 = vmatmul.mubr.bf16.gmra.mrb[0].mxu0 %v1017
        %v1176 = vpop.f32.mrb[0].mxu0
        %v1177 = vadd.f32 %v1045, %v1176
        %v1178 = vpop.f32.mrb[0].mxu0
        %v1179 = vadd.f32 %v1049, %v1178
        %v1180 = vpop.f32.mrb[0].mxu0
        %v1181 = vadd.f32 %v1045, %v1180
        %v1182 = vpop.f32.mrb[0].mxu0
        %v1183 = vadd.f32 %v1049, %v1182
        %1184 = vmatprep.mubr.bf16.mxu0 0
        %1185 = vmatmul.mubr.bf16.gmra.mrb[0].mxu0 %v1018
        %v1186 = vpop.f32.mrb[0].mxu0
        %v1187 = vadd.f32 %v1045, %v1186
        %v1188 = vpop.f32.mrb[0].mxu0
        %v1189 = vadd.f32 %v1049, %v1188
        %v1190 = vpop.f32.mrb[0].mxu0
        %v1191 = vadd.f32 %v1045, %v1190
        %v1192 = vpop.f32.mrb[0].mxu0
        %v1193 = vadd.f32 %v1049, %v1192
        %1194 = vmatprep.mubr.bf16.mxu0 0
        %1195 = vmatmul.mubr.bf16.gmra.mrb[0].mxu0 %v1019
        %v1196 = vpop.f32.mrb[0].mxu0
        %v1197 = vadd.f32 %v1045, %v1196
        %v1198 = vpop.f32.mrb[0].mxu0
        %v1199 = vadd.f32 %v1049, %v1198
        %v1200 = vpop.f32.mrb[0].mxu0
        %v1201 = vadd.f32 %v1045, %v1200
        %v1202 = vpop.f32.mrb[0].mxu0
        %v1203 = vadd.f32 %v1049, %v1202
        %1204 = vmatprep.mubr.bf16.mxu0 0
        %1205 = vmatmul.mubr.bf16.gmra.mrb[0].mxu0 %v1020
        %v1206 = vpop.f32.mrb[0].mxu0
        %v1207 = vadd.f32 %v1045, %v1206
        %v1208 = vpop.f32.mrb[0].mxu0
        %v1209 = vadd.f32 %v1049, %v1208
        %v1210 = vpop.f32.mrb[0].mxu0
        %v1211 = vadd.f32 %v1045, %v1210
        %v1212 = vpop.f32.mrb[0].mxu0
        %v1213 = vadd.f32 %v1049, %v1212
        %1214 = vmatprep.mubr.bf16.mxu0 0
        %1215 = vmatmul.mubr.bf16.gmra.mrb[0].mxu0 %v1021
        %v1216 = vpop.f32.mrb[0].mxu0
        %v1217 = vadd.f32 %v1045, %v1216
        %v1218 = vpop.f32.mrb[0].mxu0
        %v1219 = vadd.f32 %v1049, %v1218
        %v1220 = vpop.f32.mrb[0].mxu0
        %v1221 = vadd.f32 %v1045, %v1220
        %v1222 = vpop.f32.mrb[0].mxu0
        %v1223 = vadd.f32 %v1049, %v1222
        %1224 = vmatprep.mubr.bf16.mxu0 0
        %1225 = vmatmul.mubr.bf16.gmra.mrb[0].mxu0 %v1022
        %v1226 = vpop.f32.mrb[0].mxu0
        %v1227 = vadd.f32 %v1045, %v1226
        %v1228 = vpop.f32.mrb[0].mxu0
        %v1229 = vadd.f32 %v1049, %v1228
        %v1230 = vpop.f32.mrb[0].mxu0
        %v1231 = vadd.f32 %v1045, %v1230
        %v1232 = vpop.f32.mrb[0].mxu0
        %v1233 = vadd.f32 %v1049, %v1232
        %1234 = vmatprep.mubr.bf16.mxu0 0
        %1235 = vmatmul.mubr.bf16.gmra.mrb[0].mxu0 %v1023
        %v1236 = vpop.f32.mrb[0].mxu0
        %v1237 = vadd.f32 %v1045, %v1236
        %v1238 = vpop.f32.mrb[0].mxu0
        %v1239 = vadd.f32 %v1049, %v1238
        %v1240 = vpop.f32.mrb[0].mxu0
        %v1241 = vadd.f32 %v1045, %v1240
        %v1242 = vpop.f32.mrb[0].mxu0
        %v1243 = vadd.f32 %v1049, %v1242
        %1244 = vdwg.mxu0
        %v1245 = vmax.f32 %v1167, 0.0
        %v1246 = vmax.f32 %v1169, 0.0
        %v1247 = vmax.f32 %v1171, 0.0
        %v1248 = vmax.f32 %v1173, 0.0
        %v1249 = vmax.f32 %v1177, 0.0
        %v1250 = vmax.f32 %v1179, 0.0
        %v1251 = vmax.f32 %v1181, 0.0
        %v1252 = vmax.f32 %v1183, 0.0
        %v1253 = vmax.f32 %v1187, 0.0
        %v1254 = vmax.f32 %v1189, 0.0
        %v1255 = vmax.f32 %v1191, 0.0
        %v1256 = vmax.f32 %v1193, 0.0
        %v1257 = vmax.f32 %v1197, 0.0
        %v1258 = vmax.f32 %v1199, 0.0
        %v1259 = vmax.f32 %v1201, 0.0
        %v1260 = vmax.f32 %v1203, 0.0
        %v1261 = vmax.f32 %v1207, 0.0
        %v1262 = vmax.f32 %v1209, 0.0
        %v1263 = vmax.f32 %v1211, 0.0
        %v1264 = vmax.f32 %v1213, 0.0
        %v1265 = vmax.f32 %v1217, 0.0
        %v1266 = vmax.f32 %v1219, 0.0
        %v1267 = vmax.f32 %v1221, 0.0
        %v1268 = vmax.f32 %v1223, 0.0
        %v1269 = vmax.f32 %v1227, 0.0
        %v1270 = vmax.f32 %v1229, 0.0
        %v1271 = vmax.f32 %v1231, 0.0
        %v1272 = vmax.f32 %v1233, 0.0
        %v1273 = vmax.f32 %v1237, 0.0
        %v1274 = vmax.f32 %v1239, 0.0
        %v1275 = vmax.f32 %v1241, 0.0
        %v1276 = vmax.f32 %v1243, 0.0
        %v1277 = vpack.c.bf16 %v1247, %v1245
        %v1278 = vpack.c.bf16 %v1248, %v1246
        %v1279 = vpack.c.bf16 %v1251, %v1249
        %v1280 = vpack.c.bf16 %v1252, %v1250
        %v1281 = vpack.c.bf16 %v1255, %v1253
        %v1282 = vpack.c.bf16 %v1256, %v1254
        %v1283 = vpack.c.bf16 %v1259, %v1257
        %v1284 = vpack.c.bf16 %v1260, %v1258
        %v1285 = vpack.c.bf16 %v1263, %v1261
        %v1286 = vpack.c.bf16 %v1264, %v1262
        %v1287 = vpack.c.bf16 %v1267, %v1265
        %v1288 = vpack.c.bf16 %v1268, %v1266
        %v1289 = vpack.c.bf16 %v1271, %v1269
        %v1290 = vpack.c.bf16 %v1272, %v1270
        %v1291 = vpack.c.bf16 %v1275, %v1273
        %v1292 = vpack.c.bf16 %v1276, %v1274
        %v1293 = vld [vmem:[#allocation10] sm:$0xf]
        %v1294 = vld [vmem:[#allocation10 + $0x4] sm:$0xf]
        %v1295 = vld [vmem:[#allocation10 + $0x8] sm:$0xf]
        %v1296 = vld [vmem:[#allocation10 + $0xc] sm:$0xf]
        %v1297 = vld [vmem:[#allocation10 + $0x10] sm:$0xf]
        %v1298 = vld [vmem:[#allocation10 + $0x14] sm:$0xf]
        %v1299 = vld [vmem:[#allocation10 + $0x18] sm:$0xf]
        %v1300 = vld [vmem:[#allocation10 + $0x1c] sm:$0xf]
        %v1301 = vld [vmem:[#allocation10 + $0x20] sm:$0xf]
        %v1302 = vld [vmem:[#allocation10 + $0x24] sm:$0xf]
        %v1303 = vld [vmem:[#allocation10 + $0x28] sm:$0xf]
        %v1304 = vld [vmem:[#allocation10 + $0x2c] sm:$0xf]
        %v1305 = vld [vmem:[#allocation10 + $0x30] sm:$0xf]
        %v1306 = vld [vmem:[#allocation10 + $0x34] sm:$0xf]
        %v1307 = vld [vmem:[#allocation10 + $0x38] sm:$0xf]
        %v1308 = vld [vmem:[#allocation10 + $0x3c] sm:$0xf]
        %v1309 = vld [vmem:[#allocation10 + $0x40] sm:$0xf]
        %v1310 = vld [vmem:[#allocation10 + $0x44] sm:$0xf]
        %v1311 = vld [vmem:[#allocation10 + $0x48] sm:$0xf]
        %v1312 = vld [vmem:[#allocation10 + $0x4c] sm:$0xf]
        %v1313 = vld [vmem:[#allocation10 + $0x50] sm:$0xf]
        %v1314 = vld [vmem:[#allocation10 + $0x54] sm:$0xf]
        %v1315 = vld [vmem:[#allocation10 + $0x58] sm:$0xf]
        %v1316 = vld [vmem:[#allocation10 + $0x5c] sm:$0xf]
        %v1317 = vld [vmem:[#allocation10 + $0x60] sm:$0xf]
        %v1318 = vld [vmem:[#allocation10 + $0x64] sm:$0xf]
        %v1319 = vld [vmem:[#allocation10 + $0x68] sm:$0xf]
        %v1320 = vld [vmem:[#allocation10 + $0x6c] sm:$0xf]
        %v1321 = vld [vmem:[#allocation10 + $0x70] sm:$0xf]
        %v1322 = vld [vmem:[#allocation10 + $0x74] sm:$0xf]
        %v1323 = vld [vmem:[#allocation10 + $0x78] sm:$0xf]
        %v1324 = vld [vmem:[#allocation10 + $0x7c] sm:$0xf]
        %v1325 = vld [vmem:[%s8] sm:$0x1]
        %v1327 = vlaneseq
        %v1328 = vshrl.u32 %v1327, 7
        %v1329 = vsub.s32 0, %v1328
        %v1330 = vrot.slane %v1325, %v1329
        %v1364 = vunpack.c.l.b16 %v1293
        %v1365 = vunpack.c.l.b16 %v1294
        %v1366 = vunpack.c.l.b16 %v1295
        %v1367 = vunpack.c.l.b16 %v1296
        %v1368 = vunpack.c.l.b16 %v1297
        %v1369 = vunpack.c.l.b16 %v1298
        %v1370 = vunpack.c.l.b16 %v1299
        %v1371 = vunpack.c.l.b16 %v1300
        %v1372 = vunpack.c.l.b16 %v1301
        %v1373 = vunpack.c.l.b16 %v1302
        %v1374 = vunpack.c.l.b16 %v1303
        %v1375 = vunpack.c.l.b16 %v1304
        %v1376 = vunpack.c.l.b16 %v1305
        %v1377 = vunpack.c.l.b16 %v1306
        %v1378 = vunpack.c.l.b16 %v1307
        %v1379 = vunpack.c.l.b16 %v1308
        %v1380 = vunpack.c.l.b16 %v1309
        %v1381 = vunpack.c.l.b16 %v1310
        %v1382 = vunpack.c.l.b16 %v1311
        %v1383 = vunpack.c.l.b16 %v1312
        %v1384 = vunpack.c.l.b16 %v1313
        %v1385 = vunpack.c.l.b16 %v1314
        %v1386 = vunpack.c.l.b16 %v1315
        %v1387 = vunpack.c.l.b16 %v1316
        %v1388 = vunpack.c.l.b16 %v1317
        %v1389 = vunpack.c.l.b16 %v1318
        %v1390 = vunpack.c.l.b16 %v1319
        %v1391 = vunpack.c.l.b16 %v1320
        %v1392 = vunpack.c.l.b16 %v1321
        %v1393 = vunpack.c.l.b16 %v1322
        %v1394 = vunpack.c.l.b16 %v1323
        %v1395 = vunpack.c.l.b16 %v1324
        %v1396 = vpack.c.b16 %v1365, %v1364
        %v1397 = vpack.c.b16 %v1367, %v1366
        %v1398 = vpack.c.b16 %v1369, %v1368
        %v1399 = vpack.c.b16 %v1371, %v1370
        %v1400 = vpack.c.b16 %v1373, %v1372
        %v1401 = vpack.c.b16 %v1375, %v1374
        %v1402 = vpack.c.b16 %v1377, %v1376
        %v1403 = vpack.c.b16 %v1379, %v1378
        %v1404 = vpack.c.b16 %v1381, %v1380
        %v1405 = vpack.c.b16 %v1383, %v1382
        %v1406 = vpack.c.b16 %v1385, %v1384
        %v1407 = vpack.c.b16 %v1387, %v1386
        %v1408 = vpack.c.b16 %v1389, %v1388
        %v1409 = vpack.c.b16 %v1391, %v1390
        %v1410 = vpack.c.b16 %v1393, %v1392
        %v1411 = vpack.c.b16 %v1395, %v1394
        %1428 = vmatprep.subr.bf16.mxu0 0
        %1429 = vmatpush1.bf16.msra.mxu0 %v1396
        %1430 = vmatprep.subr.bf16.mxu0 0
        %1431 = vmatpush1.bf16.msra.mxu0 %v1397
        %1432 = vmatprep.subr.bf16.mxu0 0
        %1433 = vmatpush1.bf16.msra.mxu0 %v1398
        %1434 = vmatprep.subr.bf16.mxu0 0
        %1435 = vmatpush1.bf16.msra.mxu0 %v1399
        %1436 = vmatprep.subr.bf16.mxu0 0
        %1437 = vmatpush1.bf16.msra.mxu0 %v1400
        %1438 = vmatprep.subr.bf16.mxu0 0
        %1439 = vmatpush1.bf16.msra.mxu0 %v1401
        %1440 = vmatprep.subr.bf16.mxu0 0
        %1441 = vmatpush1.bf16.msra.mxu0 %v1402
        %1442 = vmatprep.subr.bf16.mxu0 0
        %1443 = vmatpush1.bf16.msra.mxu0 %v1403
        %1444 = vmatprep.subr.bf16.mxu0 0
        %1445 = vmatpush1.bf16.msra.mxu0 %v1404
        %1446 = vmatprep.subr.bf16.mxu0 0
        %1447 = vmatpush1.bf16.msra.mxu0 %v1405
        %1448 = vmatprep.subr.bf16.mxu0 0
        %1449 = vmatpush1.bf16.msra.mxu0 %v1406
        %1450 = vmatprep.subr.bf16.mxu0 0
        %1451 = vmatpush1.bf16.msra.mxu0 %v1407
        %1452 = vmatprep.subr.bf16.mxu0 0
        %1453 = vmatpush1.bf16.msra.mxu0 %v1408
        %1454 = vmatprep.subr.bf16.mxu0 0
        %1455 = vmatpush1.bf16.msra.mxu0 %v1409
        %1456 = vmatprep.subr.bf16.mxu0 0
        %1457 = vmatpush1.bf16.msra.mxu0 %v1410
        %1458 = vmatprep.subr.bf16.mxu0 0
        %1459 = vmatpush1.bf16.msra.mxu0 %v1411
        %1460 = vmatprep.mubr.bf16.mxu0 %v1278
        %1461 = vmatmul.mubr.bf16.gmra.mrb[0].mxu0 %v1277
        %v1462 = vpop.f32.mrb[0].mxu0
        %v1463 = vadd.f32 %v1330, %v1462
        %v1464 = vpop.f32.mrb[0].mxu0
        %v1465 = vpop.f32.mrb[0].mxu0
        %v1466 = vadd.f32 %v1330, %v1465
        %v1467 = vpop.f32.mrb[0].mxu0
        %1468 = vmatprep.mubr.bf16.mxu0 %v1280
        %1469 = vmatmul.mubr.bf16.gmra.mrb[0].mxu0 %v1279
        %v1470 = vpop.f32.mrb[0].mxu0
        %v1471 = vadd.f32 %v1330, %v1470
        %v1472 = vpop.f32.mrb[0].mxu0
        %v1473 = vpop.f32.mrb[0].mxu0
        %v1474 = vadd.f32 %v1330, %v1473
        %v1475 = vpop.f32.mrb[0].mxu0
        %1476 = vmatprep.mubr.bf16.mxu0 %v1282
        %1477 = vmatmul.mubr.bf16.gmra.mrb[0].mxu0 %v1281
        %v1478 = vpop.f32.mrb[0].mxu0
        %v1479 = vadd.f32 %v1330, %v1478
        %v1480 = vpop.f32.mrb[0].mxu0
        %v1481 = vpop.f32.mrb[0].mxu0
        %v1482 = vadd.f32 %v1330, %v1481
        %v1483 = vpop.f32.mrb[0].mxu0
        %1484 = vmatprep.mubr.bf16.mxu0 %v1284
        %1485 = vmatmul.mubr.bf16.gmra.mrb[0].mxu0 %v1283
        %v1486 = vpop.f32.mrb[0].mxu0
        %v1487 = vadd.f32 %v1330, %v1486
        %v1488 = vpop.f32.mrb[0].mxu0
        %v1489 = vpop.f32.mrb[0].mxu0
        %v1490 = vadd.f32 %v1330, %v1489
        %v1491 = vpop.f32.mrb[0].mxu0
        %1492 = vmatprep.mubr.bf16.mxu0 %v1286
        %1493 = vmatmul.mubr.bf16.gmra.mrb[0].mxu0 %v1285
        %v1494 = vpop.f32.mrb[0].mxu0
        %v1495 = vadd.f32 %v1330, %v1494
        %v1496 = vpop.f32.mrb[0].mxu0
        %v1497 = vpop.f32.mrb[0].mxu0
        %v1498 = vadd.f32 %v1330, %v1497
        %v1499 = vpop.f32.mrb[0].mxu0
        %1500 = vmatprep.mubr.bf16.mxu0 %v1288
        %1501 = vmatmul.mubr.bf16.gmra.mrb[0].mxu0 %v1287
        %v1502 = vpop.f32.mrb[0].mxu0
        %v1503 = vadd.f32 %v1330, %v1502
        %v1504 = vpop.f32.mrb[0].mxu0
        %v1505 = vpop.f32.mrb[0].mxu0
        %v1506 = vadd.f32 %v1330, %v1505
        %v1507 = vpop.f32.mrb[0].mxu0
        %1508 = vmatprep.mubr.bf16.mxu0 %v1290
        %1509 = vmatmul.mubr.bf16.gmra.mrb[0].mxu0 %v1289
        %v1510 = vpop.f32.mrb[0].mxu0
        %v1511 = vadd.f32 %v1330, %v1510
        %v1512 = vpop.f32.mrb[0].mxu0
        %v1513 = vpop.f32.mrb[0].mxu0
        %v1514 = vadd.f32 %v1330, %v1513
        %v1515 = vpop.f32.mrb[0].mxu0
        %1516 = vmatprep.mubr.bf16.mxu0 %v1292
        %1517 = vmatmul.mubr.bf16.gmra.mrb[0].mxu0 %v1291
        %v1518 = vpop.f32.mrb[0].mxu0
        %v1519 = vadd.f32 %v1330, %v1518
        %v1520 = vpop.f32.mrb[0].mxu0
        %v1521 = vpop.f32.mrb[0].mxu0
        %v1522 = vadd.f32 %v1330, %v1521
        %v1523 = vpop.f32.mrb[0].mxu0
        %1524 = vdwg.mxu0
        %1525 = vmax.xlane.f32.xlu0 %v1463
        %v1526 = vpop.xlane.xlu0 %1525
        %1527 = vmax.xlane.f32.xlu0 %v1466
        %v1528 = vpop.xlane.xlu0 %1527
        %1529 = vmax.xlane.f32.xlu0 %v1471
        %v1530 = vpop.xlane.xlu0 %1529
        %1531 = vmax.xlane.f32.xlu0 %v1474
        %v1532 = vpop.xlane.xlu0 %1531
        %1533 = vmax.xlane.f32.xlu0 %v1479
        %v1534 = vpop.xlane.xlu0 %1533
        %1535 = vmax.xlane.f32.xlu0 %v1482
        %v1536 = vpop.xlane.xlu0 %1535
        %1537 = vmax.xlane.f32.xlu0 %v1487
        %v1538 = vpop.xlane.xlu0 %1537
        %1539 = vmax.xlane.f32.xlu0 %v1490
        %v1540 = vpop.xlane.xlu0 %1539
        %1541 = vmax.xlane.f32.xlu0 %v1495
        %v1542 = vpop.xlane.xlu0 %1541
        %1543 = vmax.xlane.f32.xlu0 %v1498
        %v1544 = vpop.xlane.xlu0 %1543
        %1545 = vmax.xlane.f32.xlu0 %v1503
        %v1546 = vpop.xlane.xlu0 %1545
        %1547 = vmax.xlane.f32.xlu0 %v1506
        %v1548 = vpop.xlane.xlu0 %1547
        %1549 = vmax.xlane.f32.xlu0 %v1511
        %v1550 = vpop.xlane.xlu0 %1549
        %1551 = vmax.xlane.f32.xlu0 %v1514
        %v1552 = vpop.xlane.xlu0 %1551
        %1553 = vmax.xlane.f32.xlu0 %v1519
        %v1554 = vpop.xlane.xlu0 %1553
        %1555 = vmax.xlane.f32.xlu0 %v1522
        %v1556 = vpop.xlane.xlu0 %1555
        %v1557 = vsub.f32 %v1463, %v1526
        %v1558 = vsub.f32 %v1466, %v1528
        %v1559 = vsub.f32 %v1471, %v1530
        %v1560 = vsub.f32 %v1474, %v1532
        %v1561 = vsub.f32 %v1479, %v1534
        %v1562 = vsub.f32 %v1482, %v1536
        %v1563 = vsub.f32 %v1487, %v1538
        %v1564 = vsub.f32 %v1490, %v1540
        %v1565 = vsub.f32 %v1495, %v1542
        %v1566 = vsub.f32 %v1498, %v1544
        %v1567 = vsub.f32 %v1503, %v1546
        %v1568 = vsub.f32 %v1506, %v1548
        %v1569 = vsub.f32 %v1511, %v1550
        %v1570 = vsub.f32 %v1514, %v1552
        %v1571 = vsub.f32 %v1519, %v1554
        %v1572 = vsub.f32 %v1522, %v1556
        %v1573 = vmul.f32 %v1557, 1.442695
        %v1574 = vpow.pop %v1573
        %v1575 = vmul.f32 %v1558, 1.442695
        %v1576 = vpow.pop %v1575
        %v1577 = vmul.f32 %v1559, 1.442695
        %v1578 = vpow.pop %v1577
        %v1579 = vmul.f32 %v1560, 1.442695
        %v1580 = vpow.pop %v1579
        %v1581 = vmul.f32 %v1561, 1.442695
        %v1582 = vpow.pop %v1581
        %v1583 = vmul.f32 %v1562, 1.442695
        %v1584 = vpow.pop %v1583
        %v1585 = vmul.f32 %v1563, 1.442695
        %v1586 = vpow.pop %v1585
        %v1587 = vmul.f32 %v1564, 1.442695
        %v1588 = vpow.pop %v1587
        %v1589 = vmul.f32 %v1565, 1.442695
        %v1590 = vpow.pop %v1589
        %v1591 = vmul.f32 %v1566, 1.442695
        %v1592 = vpow.pop %v1591
        %v1593 = vmul.f32 %v1567, 1.442695
        %v1594 = vpow.pop %v1593
        %v1595 = vmul.f32 %v1568, 1.442695
        %v1596 = vpow.pop %v1595
        %v1597 = vmul.f32 %v1569, 1.442695
        %v1598 = vpow.pop %v1597
        %v1599 = vmul.f32 %v1570, 1.442695
        %v1600 = vpow.pop %v1599
        %v1601 = vmul.f32 %v1571, 1.442695
        %v1602 = vpow.pop %v1601
        %v1603 = vmul.f32 %v1572, 1.442695
        %v1604 = vpow.pop %v1603
        %1605 = vadd.xlane.f32.xlu0 %v1574
        %v1606 = vpop.xlane.xlu0 %1605
        %1607 = vadd.xlane.f32.xlu0 %v1576
        %v1608 = vpop.xlane.xlu0 %1607
        %1609 = vadd.xlane.f32.xlu0 %v1578
        %v1610 = vpop.xlane.xlu0 %1609
        %1611 = vadd.xlane.f32.xlu0 %v1580
        %v1612 = vpop.xlane.xlu0 %1611
        %1613 = vadd.xlane.f32.xlu0 %v1582
        %v1614 = vpop.xlane.xlu0 %1613
        %1615 = vadd.xlane.f32.xlu0 %v1584
        %v1616 = vpop.xlane.xlu0 %1615
        %1617 = vadd.xlane.f32.xlu0 %v1586
        %v1618 = vpop.xlane.xlu0 %1617
        %1619 = vadd.xlane.f32.xlu0 %v1588
        %v1620 = vpop.xlane.xlu0 %1619
        %1621 = vadd.xlane.f32.xlu0 %v1590
        %v1622 = vpop.xlane.xlu0 %1621
        %1623 = vadd.xlane.f32.xlu0 %v1592
        %v1624 = vpop.xlane.xlu0 %1623
        %1625 = vadd.xlane.f32.xlu0 %v1594
        %v1626 = vpop.xlane.xlu0 %1625
        %1627 = vadd.xlane.f32.xlu0 %v1596
        %v1628 = vpop.xlane.xlu0 %1627
        %1629 = vadd.xlane.f32.xlu0 %v1598
        %v1630 = vpop.xlane.xlu0 %1629
        %1631 = vadd.xlane.f32.xlu0 %v1600
        %v1632 = vpop.xlane.xlu0 %1631
        %1633 = vadd.xlane.f32.xlu0 %v1602
        %v1634 = vpop.xlane.xlu0 %1633
        %1635 = vadd.xlane.f32.xlu0 %v1604
        %v1636 = vpop.xlane.xlu0 %1635
        %v1637 = vrcp.pop %v1606
        %v1638 = vrcp.pop %v1608
        %v1639 = vrcp.pop %v1610
        %v1640 = vrcp.pop %v1612
        %v1641 = vrcp.pop %v1614
        %v1642 = vrcp.pop %v1616
        %v1643 = vrcp.pop %v1618
        %v1644 = vrcp.pop %v1620
        %v1645 = vrcp.pop %v1622
        %v1646 = vrcp.pop %v1624
        %v1647 = vrcp.pop %v1626
        %v1648 = vrcp.pop %v1628
        %v1649 = vrcp.pop %v1630
        %v1650 = vrcp.pop %v1632
        %v1651 = vrcp.pop %v1634
        %v1652 = vrcp.pop %v1636
        %v1653 = vmul.f32 %v1574, %v1637
        %v1654 = vmul.f32 %v1576, %v1638
        %v1655 = vmul.f32 %v1578, %v1639
        %v1656 = vmul.f32 %v1580, %v1640
        %v1657 = vmul.f32 %v1582, %v1641
        %v1658 = vmul.f32 %v1584, %v1642
        %v1659 = vmul.f32 %v1586, %v1643
        %v1660 = vmul.f32 %v1588, %v1644
        %v1661 = vmul.f32 %v1590, %v1645
        %v1662 = vmul.f32 %v1592, %v1646
        %v1663 = vmul.f32 %v1594, %v1647
        %v1664 = vmul.f32 %v1596, %v1648
        %v1665 = vmul.f32 %v1598, %v1649
        %v1666 = vmul.f32 %v1600, %v1650
        %v1667 = vmul.f32 %v1602, %v1651
        %v1668 = vmul.f32 %v1604, %v1652
        %1669 = vst [vmem:[%s439] sm:$0xff] %v954
        %1670 = vst [vmem:[%s439 + $0x8] sm:$0xff] %v957
        %1671 = vst [vmem:[%s439 + $0x10] sm:$0xff] %v962
        %1672 = vst [vmem:[%s439 + $0x18] sm:$0xff] %v965
        %1673 = vst [vmem:[%s439 + $0x20] sm:$0xff] %v970
        %1674 = vst [vmem:[%s439 + $0x28] sm:$0xff] %v973
        %1675 = vst [vmem:[%s439 + $0x30] sm:$0xff] %v978
        %1676 = vst [vmem:[%s439 + $0x38] sm:$0xff] %v981
        %1677 = vst [vmem:[%s439 + $0x40] sm:$0xff] %v986
        %1678 = vst [vmem:[%s439 + $0x48] sm:$0xff] %v989
        %1679 = vst [vmem:[%s439 + $0x50] sm:$0xff] %v994
        %1680 = vst [vmem:[%s439 + $0x58] sm:$0xff] %v997
        %1681 = vst [vmem:[%s439 + $0x60] sm:$0xff] %v1002
        %1682 = vst [vmem:[%s439 + $0x68] sm:$0xff] %v1005
        %1683 = vst [vmem:[%s439 + $0x70] sm:$0xff] %v1010
        %1684 = vst [vmem:[%s439 + $0x78] sm:$0xff] %v1013
        %1685 = vst [vmem:[%s446] sm:$0xff] %v1653
        %1686 = vst [vmem:[%s446 + $0x8] sm:$0xff] %v1654
        %1687 = vst [vmem:[%s446 + $0x10] sm:$0xff] %v1655
        %1688 = vst [vmem:[%s446 + $0x18] sm:$0xff] %v1656
        %1689 = vst [vmem:[%s446 + $0x20] sm:$0xff] %v1657
        %1690 = vst [vmem:[%s446 + $0x28] sm:$0xff] %v1658
        %1691 = vst [vmem:[%s446 + $0x30] sm:$0xff] %v1659
        %1692 = vst [vmem:[%s446 + $0x38] sm:$0xff] %v1660
        %1693 = vst [vmem:[%s446 + $0x40] sm:$0xff] %v1661
        %1694 = vst [vmem:[%s446 + $0x48] sm:$0xff] %v1662
        %1695 = vst [vmem:[%s446 + $0x50] sm:$0xff] %v1663
        %1696 = vst [vmem:[%s446 + $0x58] sm:$0xff] %v1664
        %1697 = vst [vmem:[%s446 + $0x60] sm:$0xff] %v1665
        %1698 = vst [vmem:[%s446 + $0x68] sm:$0xff] %v1666
        %1699 = vst [vmem:[%s446 + $0x70] sm:$0xff] %v1667
        %1700 = vst [vmem:[%s446 + $0x78] sm:$0xff] %v1668
        %s1701 = sand.u32 %s235, 1
        %s1702 = scalar_lea.sflag [#allocation4], %s1701
        %s1703 = sand.u32 %s235, 1
        %s1704 = smul.addr %s1703, 128
        %s1705 = scalar_lea.vmem [#allocation11], %s1704
        %s1706 = sand.u32 %s261, 1
        %s1707 = scalar_lea.sflag [#allocation13], %s1706
        %s1708 = sand.u32 %s261, 1
        %s1709 = smul.addr %s1708, 128
        %s1710 = scalar_lea.vmem [#allocation12], %s1709
        // Predicated region
        $region77: #{tpu_custom_call.1} parent=55 // pred_check
          %p1711 = pneg %p245
        $region78: #{tpu_custom_call.1} parent=55 // pred_check_branch
          %1713 = sbr.rel (%p1711) target = $region80
        $region79: #{tpu_custom_call.1} parent=55 // pred_region
          %s1714 = smul.u32 16, %s33
          %s1716 = ssub.s32 2048, 2048
          %1717 = vsyncadd %s1702, %s1716
          %s1718 = smul.addr %s1714, 128
          %s1719 = scalar_lea.hbm %s9, %s1718
          %s1720 = sshll.u32 %s1705, 4
          %s1721 = int_to_ptr.vmem [resolvable:$true] %s1720
          %1726 = dma.vmem_to_hbm [thread:$0]  %s1721, 2048, %s1719, %s1702, 128, 128, 8
        $region80: #{tpu_custom_call.1} parent=55 // pred_fallthru
          _
        // Predicated region
        $region81: #{tpu_custom_call.1} parent=55 // pred_check
          %p1727 = pneg %p271
        $region82: #{tpu_custom_call.1} parent=55 // pred_check_branch
          %1729 = sbr.rel (%p1727) target = $region84
        $region83: #{tpu_custom_call.1} parent=55 // pred_region
          %s1730 = smul.u32 16, %s33
          %s1732 = ssub.s32 2048, 2048
          %1733 = vsyncadd %s1707, %s1732
          %s1734 = smul.addr %s1730, 128
          %s1735 = scalar_lea.hbm %s10, %s1734
          %s1736 = sshll.u32 %s1710, 4
          %s1737 = int_to_ptr.vmem [resolvable:$true] %s1736
          %1742 = dma.vmem_to_hbm [thread:$0]  %s1737, 2048, %s1735, %s1707, 128, 128, 8
        $region84: #{tpu_custom_call.1} parent=55 // pred_fallthru
          _
      $region56: #{tpu_custom_call.1} parent=5 // pred_fallthru
        _
      %p1743 = scmp.le.s32.totalorder 2, %s28
      // Predicated region
      $region85: #{tpu_custom_call.1} parent=5 // pred_check
        %p1744 = pneg %p1743
      $region86: #{tpu_custom_call.1} parent=5 // pred_check_branch
        %1746 = sbr.rel (%p1744) target = $region88
      $region87: #{tpu_custom_call.1} parent=5 // pred_region
        %s1747 = ssub.s32 %s28, 2
        // Predicated region
        $region89: #{tpu_custom_call.1} parent=87 // pred_check
          %p1748 = pneg %p251
        $region90: #{tpu_custom_call.1} parent=87 // pred_check_branch
          %1750 = sbr.rel (%p1748) target = $region92
        $region91: #{tpu_custom_call.1} parent=87 // pred_region
          %s1751 = sand.u32 %s236, 1
          %s1752 = scalar_lea.sflag [#allocation4], %s1751
          %s1753 = sand.u32 %s236, 1
          %s1754 = smul.addr %s1753, 128
          %s1755 = scalar_lea.vmem [#allocation11], %s1754
          %1756 = dma.done %s1752, 2048
        $region92: #{tpu_custom_call.1} parent=87 // pred_fallthru
          _
        // Predicated region
        $region93: #{tpu_custom_call.1} parent=87 // pred_check
          %p1757 = pneg %p277
        $region94: #{tpu_custom_call.1} parent=87 // pred_check_branch
          %1759 = sbr.rel (%p1757) target = $region96
        $region95: #{tpu_custom_call.1} parent=87 // pred_region
          %s1760 = sand.u32 %s262, 1
          %s1761 = scalar_lea.sflag [#allocation13], %s1760
          %s1762 = sand.u32 %s262, 1
          %s1763 = smul.addr %s1762, 128
          %s1764 = scalar_lea.vmem [#allocation12], %s1763
          %1765 = dma.done %s1761, 2048
        $region96: #{tpu_custom_call.1} parent=87 // pred_fallthru
          _
      $region88: #{tpu_custom_call.1} parent=5 // pred_fallthru
        _
    $region6: #{tpu_custom_call.1} parent=1 // loop_footer
      %s32 = sadd.s32 1, %s28
    $region7: #{tpu_custom_call.1} parent=1 // loop_footer_branch
      %27 = sbr.rel target = $region3
    $region8: #{tpu_custom_call.1} parent=1 // loop_exit
      _
    %1766 = vsyncpa [#allocation3], 1
    %s1767 = scalar_lea.sflag [#allocation3], 1
    %1768 = vsyncpa %s1767, 1
    %1769 = vsyncpa [#allocation6], 1
    %1770 = vsyncpa [#allocation9], 1
    %1771 = vsyncpa [#allocation4], 1
    %s1772 = scalar_lea.sflag [#allocation4], 1
    %1773 = vsyncpa %s1772, 1
    %1774 = vsyncpa [#allocation13], 1
    %s1775 = scalar_lea.sflag [#allocation13], 1
    %1776 = vsyncpa %s1775, 1

</llo_original>
